<compile_context>
chip_gen: v7x
topology: tpu7x:2x2x1
jax: 0.10.0
libtpu: 0.0.40
codegen_flags: <defaults>
</compile_context>

<pallas_src>
import jax
import jax.numpy as jnp
from jax.experimental import pallas as pl
from jax.experimental.pallas import tpu as pltpu

WORD_EMBED_DIM = 32   # c.WORD_EMBED_DIM
HIDDEN = 100          # logical hidden size (PyTorch)
HP = 128              # lane-padded hidden size
SEQ = 8
BATCH = 4
BN_EPS = 1e-5


# --------------------------- fused model kernel -------------------------------
def fused_kernel(x_ref, wi_ref, wh_ref, bg_ref, w1_ref, b1_ref, w2_ref, b2_ref,
                 out_ref):
    S, B2 = SEQ, 2 * BATCH

    # Hoisted input projections for every timestep of both sentences:
    # one (S*2B, D) x (D, 3*HP) MXU pass.  Row-0 of bg holds the fused input
    # biases (b_ir+b_hr | b_iz+b_hz | b_in); row-1 holds (0 | 0 | b_hn).
    pre = (jnp.dot(x_ref[...], wi_ref[...], preferred_element_type=jnp.float32)
           + bg_ref[0:1, :])
    b_h = bg_ref[1:2, :]
    wh = wh_ref[...]

    h = jnp.zeros((B2, HP), jnp.float32)
    # Fully unrolled recurrence: indices are static, one fused-gate matmul per step.
    for t in range(S):
        p_t = pre[t * B2:(t + 1) * B2, :]                       # (2B, 3*HP)
        gh = jnp.dot(h, wh, preferred_element_type=jnp.float32) + b_h
        r = jax.nn.sigmoid(p_t[:, 0:HP] + gh[:, 0:HP])
        z = jax.nn.sigmoid(p_t[:, HP:2 * HP] + gh[:, HP:2 * HP])
        n = jnp.tanh(p_t[:, 2 * HP:3 * HP] + r * gh[:, 2 * HP:3 * HP])
        h = (1.0 - z) * n + z * h                               # padded lanes stay 0

    q1 = h[:BATCH, :]
    q2 = h[BATCH:, :]

    # Linear1 on the lane-concatenated feature slab (B, 4*HP) -> (B, HP).
    feat = jnp.concatenate([q1, q2, q1 - q2, q1 * q2], axis=1)
    h1 = jnp.dot(feat, w1_ref[...], preferred_element_type=jnp.float32) + b1_ref[...]

    # BatchNorm1d in training mode: batch statistics (biased variance),
    # gamma=1 / beta=0 (the PyTorch module constructs a fresh BN every forward).
    mean = jnp.mean(h1, axis=0, keepdims=True)
    var = jnp.mean((h1 - mean) * (h1 - mean), axis=0, keepdims=True)
    h_bn = (h1 - mean) * jax.lax.rsqrt(var + BN_EPS)

    # ReLU
    h_relu = jnp.maximum(h_bn, 0.0)

    # Linear2 + LogSoftmax(dim=1)
    logits = (jnp.dot(h_relu, w2_ref[...], preferred_element_type=jnp.float32)
              + b2_ref[...])
    m = jnp.max(logits, axis=1, keepdims=True)
    shifted = logits - m
    lse = jnp.log(jnp.sum(jnp.exp(shifted), axis=1, keepdims=True))
    out_ref[...] = shifted - lse


def model_forward_pallas(x2d, p):
    """x2d: (S*2B, D) time-major rows [t=0: q1-batch|q2-batch, t=1: ..., ...]."""
    full = lambda shape: pl.BlockSpec(shape, lambda i: (0, 0))
    return pl.pallas_call(
        fused_kernel,
        out_shape=jax.ShapeDtypeStruct((BATCH, 2), jnp.float32),
        grid_spec=pltpu.PrefetchScalarGridSpec(
            num_scalar_prefetch=0,
            grid=(1,),
            in_specs=[
                full((SEQ * 2 * BATCH, WORD_EMBED_DIM)),   # x (all timesteps, 2B rows)
                full((WORD_EMBED_DIM, 3 * HP)),            # fused input weights
                full((HP, 3 * HP)),                        # fused hidden weights
                full((2, 3 * HP)),                         # packed GRU biases
                full((4 * HP, HP)),                        # W1 (padded)
                full((1, HP)),                             # b1 (padded)
                full((HP, 2)),                             # W2 (padded rows)
                full((1, 2)),                              # b2
            ],
            out_specs=pl.BlockSpec((BATCH, 2), lambda i: (0, 0)),
        ),
        compiler_params=pltpu.CompilerParams(
            dimension_semantics=("arbitrary",)),
    )(x2d, p["w_i"], p["w_h"], p["b_gru"], p["w1"], p["b1"], p["w2"], p["b2"])


@jax.jit
def model_forward(q1, q2, packed):
    # Stack both sentences on the batch axis and flatten time into rows so the
    # kernel can do the whole input projection as one matmul.
    x = jnp.concatenate([q1, q2], axis=1)                    # (S, 2B, D)
    x2d = x.reshape(SEQ * 2 * BATCH, WORD_EMBED_DIM)
    return model_forward_pallas(x2d, packed)


# ------------------------------ parameters ------------------------------------
def init_raw_params(key):
    """PyTorch-layout parameters (for packing and for the pure-JAX reference)."""
    D, H = WORD_EMBED_DIM, HIDDEN
    ks = jax.random.split(key, 8)
    u = lambda kk, shape, s: jax.random.uniform(kk, shape, jnp.float32, -s, s)
    kg = 1.0 / jnp.sqrt(float(H))
    k1 = 1.0 / jnp.sqrt(400.0)
    k2 = 1.0 / jnp.sqrt(float(H))
    return {
        "w_ih": u(ks[0], (3 * H, D), kg),   # gate order r, z, n
        "w_hh": u(ks[1], (3 * H, H), kg),
        "b_ih": u(ks[2], (3 * H,), kg),
        "b_hh": u(ks[3], (3 * H,), kg),
        "w1": u(ks[4], (H, 400), k1),
        "b1": u(ks[5], (H,), k1),
        "w2": u(ks[6], (2, H), k2),
        "b2": u(ks[7], (2,), k2),
    }


def pack_params(raw):
    """Pad H->HP, fuse gate weights, pre-transpose, split W1 by concat block."""
    D, H = WORD_EMBED_DIM, HIDDEN

    def gate(mat, g):           # (3H, X) -> (H, X) block for gate g in (r,z,n)
        return mat[g * H:(g + 1) * H]

    w_i = jnp.zeros((D, 3 * HP), jnp.float32)
    w_h = jnp.zeros((HP, 3 * HP), jnp.float32)
    b_gru = jnp.zeros((2, 3 * HP), jnp.float32)
    for g in range(3):
        w_i = w_i.at[:, g * HP:g * HP + H].set(gate(raw["w_ih"], g).T)
        w_h = w_h.at[:H, g * HP:g * HP + H].set(gate(raw["w_hh"], g).T)
    # row 0: input-side biases (r,z fused with hidden biases; n kept separate)
    b_gru = b_gru.at[0, 0 * HP:0 * HP + H].set(raw["b_ih"][0:H] + raw["b_hh"][0:H])
    b_gru = b_gru.at[0, 1 * HP:1 * HP + H].set(raw["b_ih"][H:2 * H] + raw["b_hh"][H:2 * H])
    b_gru = b_gru.at[0, 2 * HP:2 * HP + H].set(raw["b_ih"][2 * H:3 * H])
    # row 1: hidden-side n bias (applied inside r * (.) )
    b_gru = b_gru.at[1, 2 * HP:2 * HP + H].set(raw["b_hh"][2 * H:3 * H])

    # Linear1: (100, 400) -> padded (4*HP, HP); block b of the concat maps to rows
    # [b*HP, b*HP+H), columns [0, H).
    w1 = jnp.zeros((4 * HP, HP), jnp.float32)
    for b in range(4):
        w1 = w1.at[b * HP:b * HP + H, 0:H].set(raw["w1"][:, b * H:(b + 1) * H].T)
    b1 = jnp.zeros((1, HP), jnp.float32).at[0, 0:H].set(raw["b1"])

    w2 = jnp.zeros((HP, 2), jnp.float32).at[0:H, :].set(raw["w2"].T)
    b2 = raw["b2"].reshape(1, 2)

    return {"w_i": w_i, "w_h": w_h, "b_gru": b_gru,
            "w1": w1, "b1": b1, "w2": w2, "b2": b2}


# --------------------------- pure-JAX reference --------------------------------
def reference_forward(q1, q2, raw):
    H = HIDDEN

    def gru_last(x):
        h = jnp.zeros((x.shape[1], H), jnp.float32)
        for t in range(x.shape[0]):
            gi = x[t] @ raw["w_ih"].T + raw["b_ih"]
            gh = h @ raw["w_hh"].T + raw["b_hh"]
            i_r, i_z, i_n = gi[:, :H], gi[:, H:2 * H], gi[:, 2 * H:]
            h_r, h_z, h_n = gh[:, :H], gh[:, H:2 * H], gh[:, 2 * H:]
            r = jax.nn.sigmoid(i_r + h_r)
            z = jax.nn.sigmoid(i_z + h_z)
            n = jnp.tanh(i_n + r * h_n)
            h = (1.0 - z) * n + z * h
        return h

    e1, e2 = gru_last(q1), gru_last(q2)
    feat = jnp.concatenate([e1, e2, e1 - e2, e1 * e2], axis=1)
    h1 = feat @ raw["w1"].T + raw["b1"]
    mean = jnp.mean(h1, axis=0, keepdims=True)
    var = jnp.mean((h1 - mean) ** 2, axis=0, keepdims=True)
    h_bn = (h1 - mean) * jax.lax.rsqrt(var + BN_EPS)
    h_relu = jnp.maximum(h_bn, 0.0)
    logits = h_relu @ raw["w2"].T + raw["b2"]
    return jax.nn.log_softmax(logits, axis=1)


# ----------------------------------- main --------------------------------------
if __name__ == "__main__":
    key = jax.random.PRNGKey(0)
    kq1, kq2, kp = jax.random.split(key, 3)

    # (seq, batch, embed) — time-major, matching nn.GRU default (batch_first=False).
    q1 = jax.random.normal(kq1, (SEQ, BATCH, WORD_EMBED_DIM), jnp.float32)
    q2 = jax.random.normal(kq2, (SEQ, BATCH, WORD_EMBED_DIM), jnp.float32)

    raw = init_raw_params(kp)
    packed = pack_params(raw)

    out = model_forward(q1, q2, packed)
    jax.block_until_ready(out)

    assert out.shape == (BATCH, 2)
    # log-softmax rows must exp-sum to 1
    assert jnp.allclose(jnp.sum(jnp.exp(out), axis=1), 1.0, atol=1e-5)
    # check against the pure-JAX reference of the PyTorch forward pass
    ref = reference_forward(q1, q2, raw)
    assert jnp.allclose(out, ref, atol=2e-4, rtol=2e-3), (out, ref)
    print("KERNEL_OK")
</pallas_src>

<mosaic_0001>
module attributes {stable_mosaic.version = 11 : i64} {
  func.func @fused_kernel(%arg0: i32, %arg1: memref<64x32xf32, #tpu.memory_space<vmem>>, %arg2: memref<32x384xf32, #tpu.memory_space<vmem>>, %arg3: memref<128x384xf32, #tpu.memory_space<vmem>>, %arg4: memref<2x384xf32, #tpu.memory_space<vmem>>, %arg5: memref<512x128xf32, #tpu.memory_space<vmem>>, %arg6: memref<1x128xf32, #tpu.memory_space<vmem>>, %arg7: memref<128x2xf32, #tpu.memory_space<vmem>>, %arg8: memref<1x2xf32, #tpu.memory_space<vmem>>, %arg9: memref<4x2xf32, #tpu.memory_space<vmem>>) attributes {dimension_semantics = [#tpu.dimension_semantics<arbitrary>], iteration_bounds = array<i64: 1>, scalar_prefetch = 0 : i64, scratch_operands = 0 : i64, tpu.core_type = #tpu.core_type<tc>, window_params = [{pipeline_mode = #tpu.pipeline_mode<synchronous>, transform_indices = @transform_0, window_bounds = array<i64: 64, 32>}, {pipeline_mode = #tpu.pipeline_mode<synchronous>, transform_indices = @transform_1, window_bounds = array<i64: 32, 384>}, {pipeline_mode = #tpu.pipeline_mode<synchronous>, transform_indices = @transform_2, window_bounds = array<i64: 128, 384>}, {pipeline_mode = #tpu.pipeline_mode<synchronous>, transform_indices = @transform_3, window_bounds = array<i64: 2, 384>}, {pipeline_mode = #tpu.pipeline_mode<synchronous>, transform_indices = @transform_4, window_bounds = array<i64: 512, 128>}, {pipeline_mode = #tpu.pipeline_mode<synchronous>, transform_indices = @transform_5, window_bounds = array<i64: 1, 128>}, {pipeline_mode = #tpu.pipeline_mode<synchronous>, transform_indices = @transform_6, window_bounds = array<i64: 128, 2>}, {pipeline_mode = #tpu.pipeline_mode<synchronous>, transform_indices = @transform_7, window_bounds = array<i64: 1, 2>}, {pipeline_mode = #tpu.pipeline_mode<synchronous>, transform_indices = @transform_8, window_bounds = array<i64: 4, 2>}]} {
    %c0 = arith.constant 0 : index
    %c0_0 = arith.constant 0 : index
    %0 = vector.load %arg1[%c0, %c0_0] : memref<64x32xf32, #tpu.memory_space<vmem>>, vector<64x32xf32>
    %c0_1 = arith.constant 0 : index
    %c0_2 = arith.constant 0 : index
    %1 = vector.load %arg2[%c0_1, %c0_2] : memref<32x384xf32, #tpu.memory_space<vmem>>, vector<32x384xf32>
    %cst = arith.constant dense<0.000000e+00> : vector<64x384xf32>
    %2 = tpu.matmul %0, %1, %cst {dimension_numbers = #tpu.dot_dimension_numbers<[1], [0], [0], [1], [0, 0, 1, 1], [], []>} : vector<64x32xf32>, vector<32x384xf32>, vector<64x384xf32> -> vector<64x384xf32>
    %c0_3 = arith.constant 0 : index
    %c0_4 = arith.constant 0 : index
    %3 = vector.load %arg4[%c0_3, %c0_4] : memref<2x384xf32, #tpu.memory_space<vmem>>, vector<1x384xf32>
    %4 = vector.broadcast %3 : vector<1x384xf32> to vector<64x384xf32>
    %5 = arith.addf %2, %4 : vector<64x384xf32>
    %c1 = arith.constant 1 : index
    %c0_5 = arith.constant 0 : index
    %6 = vector.load %arg4[%c1, %c0_5] : memref<2x384xf32, #tpu.memory_space<vmem>>, vector<1x384xf32>
    %c0_6 = arith.constant 0 : index
    %c0_7 = arith.constant 0 : index
    %7 = vector.load %arg3[%c0_6, %c0_7] : memref<128x384xf32, #tpu.memory_space<vmem>>, vector<128x384xf32>
    %cst_8 = arith.constant 0.000000e+00 : f32
    %8 = vector.broadcast %cst_8 : f32 to vector<8x128xf32>
    %9 = vector.extract_strided_slice %5 {offsets = [0, 0], sizes = [8, 384], strides = [1, 1]} : vector<64x384xf32> to vector<8x384xf32>
    %cst_9 = arith.constant dense<0.000000e+00> : vector<8x384xf32>
    %10 = tpu.matmul %8, %7, %cst_9 {dimension_numbers = #tpu.dot_dimension_numbers<[1], [0], [0], [1], [0, 0, 1, 1], [], []>} : vector<8x128xf32>, vector<128x384xf32>, vector<8x384xf32> -> vector<8x384xf32>
    %11 = vector.broadcast %6 : vector<1x384xf32> to vector<8x384xf32>
    %12 = arith.addf %10, %11 : vector<8x384xf32>
    %13 = vector.extract_strided_slice %9 {offsets = [0, 0], sizes = [8, 128], strides = [1, 1]} : vector<8x384xf32> to vector<8x128xf32>
    %14 = vector.extract_strided_slice %12 {offsets = [0, 0], sizes = [8, 128], strides = [1, 1]} : vector<8x384xf32> to vector<8x128xf32>
    %15 = arith.addf %13, %14 : vector<8x128xf32>
    %16 = arith.negf %15 : vector<8x128xf32>
    %17 = math.exp %16 : vector<8x128xf32>
    %cst_10 = arith.constant 1.000000e+00 : f32
    %18 = vector.broadcast %cst_10 : f32 to vector<8x128xf32>
    %19 = arith.addf %18, %17 : vector<8x128xf32>
    %20 = arith.divf %18, %19 : vector<8x128xf32>
    %21 = vector.extract_strided_slice %9 {offsets = [0, 128], sizes = [8, 128], strides = [1, 1]} : vector<8x384xf32> to vector<8x128xf32>
    %22 = vector.extract_strided_slice %12 {offsets = [0, 128], sizes = [8, 128], strides = [1, 1]} : vector<8x384xf32> to vector<8x128xf32>
    %23 = arith.addf %21, %22 : vector<8x128xf32>
    %24 = arith.negf %23 : vector<8x128xf32>
    %25 = math.exp %24 : vector<8x128xf32>
    %cst_11 = arith.constant 1.000000e+00 : f32
    %26 = vector.broadcast %cst_11 : f32 to vector<8x128xf32>
    %27 = arith.addf %26, %25 : vector<8x128xf32>
    %28 = arith.divf %26, %27 : vector<8x128xf32>
    %29 = vector.extract_strided_slice %9 {offsets = [0, 256], sizes = [8, 128], strides = [1, 1]} : vector<8x384xf32> to vector<8x128xf32>
    %30 = vector.extract_strided_slice %12 {offsets = [0, 256], sizes = [8, 128], strides = [1, 1]} : vector<8x384xf32> to vector<8x128xf32>
    %31 = arith.mulf %20, %30 : vector<8x128xf32>
    %32 = arith.addf %29, %31 : vector<8x128xf32>
    %33 = math.tanh %32 : vector<8x128xf32>
    %cst_12 = arith.constant 1.000000e+00 : f32
    %34 = vector.broadcast %cst_12 : f32 to vector<8x128xf32>
    %35 = arith.subf %34, %28 : vector<8x128xf32>
    %36 = arith.mulf %35, %33 : vector<8x128xf32>
    %37 = arith.mulf %28, %8 : vector<8x128xf32>
    %38 = arith.addf %36, %37 : vector<8x128xf32>
    %39 = vector.extract_strided_slice %5 {offsets = [8, 0], sizes = [8, 384], strides = [1, 1]} : vector<64x384xf32> to vector<8x384xf32>
    %cst_13 = arith.constant dense<0.000000e+00> : vector<8x384xf32>
    %40 = tpu.matmul %38, %7, %cst_13 {dimension_numbers = #tpu.dot_dimension_numbers<[1], [0], [0], [1], [0, 0, 1, 1], [], []>} : vector<8x128xf32>, vector<128x384xf32>, vector<8x384xf32> -> vector<8x384xf32>
    %41 = vector.broadcast %6 : vector<1x384xf32> to vector<8x384xf32>
    %42 = arith.addf %40, %41 : vector<8x384xf32>
    %43 = vector.extract_strided_slice %39 {offsets = [0, 0], sizes = [8, 128], strides = [1, 1]} : vector<8x384xf32> to vector<8x128xf32>
    %44 = vector.extract_strided_slice %42 {offsets = [0, 0], sizes = [8, 128], strides = [1, 1]} : vector<8x384xf32> to vector<8x128xf32>
    %45 = arith.addf %43, %44 : vector<8x128xf32>
    %46 = arith.negf %45 : vector<8x128xf32>
    %47 = math.exp %46 : vector<8x128xf32>
    %cst_14 = arith.constant 1.000000e+00 : f32
    %48 = vector.broadcast %cst_14 : f32 to vector<8x128xf32>
    %49 = arith.addf %48, %47 : vector<8x128xf32>
    %50 = arith.divf %48, %49 : vector<8x128xf32>
    %51 = vector.extract_strided_slice %39 {offsets = [0, 128], sizes = [8, 128], strides = [1, 1]} : vector<8x384xf32> to vector<8x128xf32>
    %52 = vector.extract_strided_slice %42 {offsets = [0, 128], sizes = [8, 128], strides = [1, 1]} : vector<8x384xf32> to vector<8x128xf32>
    %53 = arith.addf %51, %52 : vector<8x128xf32>
    %54 = arith.negf %53 : vector<8x128xf32>
    %55 = math.exp %54 : vector<8x128xf32>
    %cst_15 = arith.constant 1.000000e+00 : f32
    %56 = vector.broadcast %cst_15 : f32 to vector<8x128xf32>
    %57 = arith.addf %56, %55 : vector<8x128xf32>
    %58 = arith.divf %56, %57 : vector<8x128xf32>
    %59 = vector.extract_strided_slice %39 {offsets = [0, 256], sizes = [8, 128], strides = [1, 1]} : vector<8x384xf32> to vector<8x128xf32>
    %60 = vector.extract_strided_slice %42 {offsets = [0, 256], sizes = [8, 128], strides = [1, 1]} : vector<8x384xf32> to vector<8x128xf32>
    %61 = arith.mulf %50, %60 : vector<8x128xf32>
    %62 = arith.addf %59, %61 : vector<8x128xf32>
    %63 = math.tanh %62 : vector<8x128xf32>
    %cst_16 = arith.constant 1.000000e+00 : f32
    %64 = vector.broadcast %cst_16 : f32 to vector<8x128xf32>
    %65 = arith.subf %64, %58 : vector<8x128xf32>
    %66 = arith.mulf %65, %63 : vector<8x128xf32>
    %67 = arith.mulf %58, %38 : vector<8x128xf32>
    %68 = arith.addf %66, %67 : vector<8x128xf32>
    %69 = vector.extract_strided_slice %5 {offsets = [16, 0], sizes = [8, 384], strides = [1, 1]} : vector<64x384xf32> to vector<8x384xf32>
    %cst_17 = arith.constant dense<0.000000e+00> : vector<8x384xf32>
    %70 = tpu.matmul %68, %7, %cst_17 {dimension_numbers = #tpu.dot_dimension_numbers<[1], [0], [0], [1], [0, 0, 1, 1], [], []>} : vector<8x128xf32>, vector<128x384xf32>, vector<8x384xf32> -> vector<8x384xf32>
    %71 = vector.broadcast %6 : vector<1x384xf32> to vector<8x384xf32>
    %72 = arith.addf %70, %71 : vector<8x384xf32>
    %73 = vector.extract_strided_slice %69 {offsets = [0, 0], sizes = [8, 128], strides = [1, 1]} : vector<8x384xf32> to vector<8x128xf32>
    %74 = vector.extract_strided_slice %72 {offsets = [0, 0], sizes = [8, 128], strides = [1, 1]} : vector<8x384xf32> to vector<8x128xf32>
    %75 = arith.addf %73, %74 : vector<8x128xf32>
    %76 = arith.negf %75 : vector<8x128xf32>
    %77 = math.exp %76 : vector<8x128xf32>
    %cst_18 = arith.constant 1.000000e+00 : f32
    %78 = vector.broadcast %cst_18 : f32 to vector<8x128xf32>
    %79 = arith.addf %78, %77 : vector<8x128xf32>
    %80 = arith.divf %78, %79 : vector<8x128xf32>
    %81 = vector.extract_strided_slice %69 {offsets = [0, 128], sizes = [8, 128], strides = [1, 1]} : vector<8x384xf32> to vector<8x128xf32>
    %82 = vector.extract_strided_slice %72 {offsets = [0, 128], sizes = [8, 128], strides = [1, 1]} : vector<8x384xf32> to vector<8x128xf32>
    %83 = arith.addf %81, %82 : vector<8x128xf32>
    %84 = arith.negf %83 : vector<8x128xf32>
    %85 = math.exp %84 : vector<8x128xf32>
    %cst_19 = arith.constant 1.000000e+00 : f32
    %86 = vector.broadcast %cst_19 : f32 to vector<8x128xf32>
    %87 = arith.addf %86, %85 : vector<8x128xf32>
    %88 = arith.divf %86, %87 : vector<8x128xf32>
    %89 = vector.extract_strided_slice %69 {offsets = [0, 256], sizes = [8, 128], strides = [1, 1]} : vector<8x384xf32> to vector<8x128xf32>
    %90 = vector.extract_strided_slice %72 {offsets = [0, 256], sizes = [8, 128], strides = [1, 1]} : vector<8x384xf32> to vector<8x128xf32>
    %91 = arith.mulf %80, %90 : vector<8x128xf32>
    %92 = arith.addf %89, %91 : vector<8x128xf32>
    %93 = math.tanh %92 : vector<8x128xf32>
    %cst_20 = arith.constant 1.000000e+00 : f32
    %94 = vector.broadcast %cst_20 : f32 to vector<8x128xf32>
    %95 = arith.subf %94, %88 : vector<8x128xf32>
    %96 = arith.mulf %95, %93 : vector<8x128xf32>
    %97 = arith.mulf %88, %68 : vector<8x128xf32>
    %98 = arith.addf %96, %97 : vector<8x128xf32>
    %99 = vector.extract_strided_slice %5 {offsets = [24, 0], sizes = [8, 384], strides = [1, 1]} : vector<64x384xf32> to vector<8x384xf32>
    %cst_21 = arith.constant dense<0.000000e+00> : vector<8x384xf32>
    %100 = tpu.matmul %98, %7, %cst_21 {dimension_numbers = #tpu.dot_dimension_numbers<[1], [0], [0], [1], [0, 0, 1, 1], [], []>} : vector<8x128xf32>, vector<128x384xf32>, vector<8x384xf32> -> vector<8x384xf32>
    %101 = vector.broadcast %6 : vector<1x384xf32> to vector<8x384xf32>
    %102 = arith.addf %100, %101 : vector<8x384xf32>
    %103 = vector.extract_strided_slice %99 {offsets = [0, 0], sizes = [8, 128], strides = [1, 1]} : vector<8x384xf32> to vector<8x128xf32>
    %104 = vector.extract_strided_slice %102 {offsets = [0, 0], sizes = [8, 128], strides = [1, 1]} : vector<8x384xf32> to vector<8x128xf32>
    %105 = arith.addf %103, %104 : vector<8x128xf32>
    %106 = arith.negf %105 : vector<8x128xf32>
    %107 = math.exp %106 : vector<8x128xf32>
    %cst_22 = arith.constant 1.000000e+00 : f32
    %108 = vector.broadcast %cst_22 : f32 to vector<8x128xf32>
    %109 = arith.addf %108, %107 : vector<8x128xf32>
    %110 = arith.divf %108, %109 : vector<8x128xf32>
    %111 = vector.extract_strided_slice %99 {offsets = [0, 128], sizes = [8, 128], strides = [1, 1]} : vector<8x384xf32> to vector<8x128xf32>
    %112 = vector.extract_strided_slice %102 {offsets = [0, 128], sizes = [8, 128], strides = [1, 1]} : vector<8x384xf32> to vector<8x128xf32>
    %113 = arith.addf %111, %112 : vector<8x128xf32>
    %114 = arith.negf %113 : vector<8x128xf32>
    %115 = math.exp %114 : vector<8x128xf32>
    %cst_23 = arith.constant 1.000000e+00 : f32
    %116 = vector.broadcast %cst_23 : f32 to vector<8x128xf32>
    %117 = arith.addf %116, %115 : vector<8x128xf32>
    %118 = arith.divf %116, %117 : vector<8x128xf32>
    %119 = vector.extract_strided_slice %99 {offsets = [0, 256], sizes = [8, 128], strides = [1, 1]} : vector<8x384xf32> to vector<8x128xf32>
    %120 = vector.extract_strided_slice %102 {offsets = [0, 256], sizes = [8, 128], strides = [1, 1]} : vector<8x384xf32> to vector<8x128xf32>
    %121 = arith.mulf %110, %120 : vector<8x128xf32>
    %122 = arith.addf %119, %121 : vector<8x128xf32>
    %123 = math.tanh %122 : vector<8x128xf32>
    %cst_24 = arith.constant 1.000000e+00 : f32
    %124 = vector.broadcast %cst_24 : f32 to vector<8x128xf32>
    %125 = arith.subf %124, %118 : vector<8x128xf32>
    %126 = arith.mulf %125, %123 : vector<8x128xf32>
    %127 = arith.mulf %118, %98 : vector<8x128xf32>
    %128 = arith.addf %126, %127 : vector<8x128xf32>
    %129 = vector.extract_strided_slice %5 {offsets = [32, 0], sizes = [8, 384], strides = [1, 1]} : vector<64x384xf32> to vector<8x384xf32>
    %cst_25 = arith.constant dense<0.000000e+00> : vector<8x384xf32>
    %130 = tpu.matmul %128, %7, %cst_25 {dimension_numbers = #tpu.dot_dimension_numbers<[1], [0], [0], [1], [0, 0, 1, 1], [], []>} : vector<8x128xf32>, vector<128x384xf32>, vector<8x384xf32> -> vector<8x384xf32>
    %131 = vector.broadcast %6 : vector<1x384xf32> to vector<8x384xf32>
    %132 = arith.addf %130, %131 : vector<8x384xf32>
    %133 = vector.extract_strided_slice %129 {offsets = [0, 0], sizes = [8, 128], strides = [1, 1]} : vector<8x384xf32> to vector<8x128xf32>
    %134 = vector.extract_strided_slice %132 {offsets = [0, 0], sizes = [8, 128], strides = [1, 1]} : vector<8x384xf32> to vector<8x128xf32>
    %135 = arith.addf %133, %134 : vector<8x128xf32>
    %136 = arith.negf %135 : vector<8x128xf32>
    %137 = math.exp %136 : vector<8x128xf32>
    %cst_26 = arith.constant 1.000000e+00 : f32
    %138 = vector.broadcast %cst_26 : f32 to vector<8x128xf32>
    %139 = arith.addf %138, %137 : vector<8x128xf32>
    %140 = arith.divf %138, %139 : vector<8x128xf32>
    %141 = vector.extract_strided_slice %129 {offsets = [0, 128], sizes = [8, 128], strides = [1, 1]} : vector<8x384xf32> to vector<8x128xf32>
    %142 = vector.extract_strided_slice %132 {offsets = [0, 128], sizes = [8, 128], strides = [1, 1]} : vector<8x384xf32> to vector<8x128xf32>
    %143 = arith.addf %141, %142 : vector<8x128xf32>
    %144 = arith.negf %143 : vector<8x128xf32>
    %145 = math.exp %144 : vector<8x128xf32>
    %cst_27 = arith.constant 1.000000e+00 : f32
    %146 = vector.broadcast %cst_27 : f32 to vector<8x128xf32>
    %147 = arith.addf %146, %145 : vector<8x128xf32>
    %148 = arith.divf %146, %147 : vector<8x128xf32>
    %149 = vector.extract_strided_slice %129 {offsets = [0, 256], sizes = [8, 128], strides = [1, 1]} : vector<8x384xf32> to vector<8x128xf32>
    %150 = vector.extract_strided_slice %132 {offsets = [0, 256], sizes = [8, 128], strides = [1, 1]} : vector<8x384xf32> to vector<8x128xf32>
    %151 = arith.mulf %140, %150 : vector<8x128xf32>
    %152 = arith.addf %149, %151 : vector<8x128xf32>
    %153 = math.tanh %152 : vector<8x128xf32>
    %cst_28 = arith.constant 1.000000e+00 : f32
    %154 = vector.broadcast %cst_28 : f32 to vector<8x128xf32>
    %155 = arith.subf %154, %148 : vector<8x128xf32>
    %156 = arith.mulf %155, %153 : vector<8x128xf32>
    %157 = arith.mulf %148, %128 : vector<8x128xf32>
    %158 = arith.addf %156, %157 : vector<8x128xf32>
    %159 = vector.extract_strided_slice %5 {offsets = [40, 0], sizes = [8, 384], strides = [1, 1]} : vector<64x384xf32> to vector<8x384xf32>
    %cst_29 = arith.constant dense<0.000000e+00> : vector<8x384xf32>
    %160 = tpu.matmul %158, %7, %cst_29 {dimension_numbers = #tpu.dot_dimension_numbers<[1], [0], [0], [1], [0, 0, 1, 1], [], []>} : vector<8x128xf32>, vector<128x384xf32>, vector<8x384xf32> -> vector<8x384xf32>
    %161 = vector.broadcast %6 : vector<1x384xf32> to vector<8x384xf32>
    %162 = arith.addf %160, %161 : vector<8x384xf32>
    %163 = vector.extract_strided_slice %159 {offsets = [0, 0], sizes = [8, 128], strides = [1, 1]} : vector<8x384xf32> to vector<8x128xf32>
    %164 = vector.extract_strided_slice %162 {offsets = [0, 0], sizes = [8, 128], strides = [1, 1]} : vector<8x384xf32> to vector<8x128xf32>
    %165 = arith.addf %163, %164 : vector<8x128xf32>
    %166 = arith.negf %165 : vector<8x128xf32>
    %167 = math.exp %166 : vector<8x128xf32>
    %cst_30 = arith.constant 1.000000e+00 : f32
    %168 = vector.broadcast %cst_30 : f32 to vector<8x128xf32>
    %169 = arith.addf %168, %167 : vector<8x128xf32>
    %170 = arith.divf %168, %169 : vector<8x128xf32>
    %171 = vector.extract_strided_slice %159 {offsets = [0, 128], sizes = [8, 128], strides = [1, 1]} : vector<8x384xf32> to vector<8x128xf32>
    %172 = vector.extract_strided_slice %162 {offsets = [0, 128], sizes = [8, 128], strides = [1, 1]} : vector<8x384xf32> to vector<8x128xf32>
    %173 = arith.addf %171, %172 : vector<8x128xf32>
    %174 = arith.negf %173 : vector<8x128xf32>
    %175 = math.exp %174 : vector<8x128xf32>
    %cst_31 = arith.constant 1.000000e+00 : f32
    %176 = vector.broadcast %cst_31 : f32 to vector<8x128xf32>
    %177 = arith.addf %176, %175 : vector<8x128xf32>
    %178 = arith.divf %176, %177 : vector<8x128xf32>
    %179 = vector.extract_strided_slice %159 {offsets = [0, 256], sizes = [8, 128], strides = [1, 1]} : vector<8x384xf32> to vector<8x128xf32>
    %180 = vector.extract_strided_slice %162 {offsets = [0, 256], sizes = [8, 128], strides = [1, 1]} : vector<8x384xf32> to vector<8x128xf32>
    %181 = arith.mulf %170, %180 : vector<8x128xf32>
    %182 = arith.addf %179, %181 : vector<8x128xf32>
    %183 = math.tanh %182 : vector<8x128xf32>
    %cst_32 = arith.constant 1.000000e+00 : f32
    %184 = vector.broadcast %cst_32 : f32 to vector<8x128xf32>
    %185 = arith.subf %184, %178 : vector<8x128xf32>
    %186 = arith.mulf %185, %183 : vector<8x128xf32>
    %187 = arith.mulf %178, %158 : vector<8x128xf32>
    %188 = arith.addf %186, %187 : vector<8x128xf32>
    %189 = vector.extract_strided_slice %5 {offsets = [48, 0], sizes = [8, 384], strides = [1, 1]} : vector<64x384xf32> to vector<8x384xf32>
    %cst_33 = arith.constant dense<0.000000e+00> : vector<8x384xf32>
    %190 = tpu.matmul %188, %7, %cst_33 {dimension_numbers = #tpu.dot_dimension_numbers<[1], [0], [0], [1], [0, 0, 1, 1], [], []>} : vector<8x128xf32>, vector<128x384xf32>, vector<8x384xf32> -> vector<8x384xf32>
    %191 = vector.broadcast %6 : vector<1x384xf32> to vector<8x384xf32>
    %192 = arith.addf %190, %191 : vector<8x384xf32>
    %193 = vector.extract_strided_slice %189 {offsets = [0, 0], sizes = [8, 128], strides = [1, 1]} : vector<8x384xf32> to vector<8x128xf32>
    %194 = vector.extract_strided_slice %192 {offsets = [0, 0], sizes = [8, 128], strides = [1, 1]} : vector<8x384xf32> to vector<8x128xf32>
    %195 = arith.addf %193, %194 : vector<8x128xf32>
    %196 = arith.negf %195 : vector<8x128xf32>
    %197 = math.exp %196 : vector<8x128xf32>
    %cst_34 = arith.constant 1.000000e+00 : f32
    %198 = vector.broadcast %cst_34 : f32 to vector<8x128xf32>
    %199 = arith.addf %198, %197 : vector<8x128xf32>
    %200 = arith.divf %198, %199 : vector<8x128xf32>
    %201 = vector.extract_strided_slice %189 {offsets = [0, 128], sizes = [8, 128], strides = [1, 1]} : vector<8x384xf32> to vector<8x128xf32>
    %202 = vector.extract_strided_slice %192 {offsets = [0, 128], sizes = [8, 128], strides = [1, 1]} : vector<8x384xf32> to vector<8x128xf32>
    %203 = arith.addf %201, %202 : vector<8x128xf32>
    %204 = arith.negf %203 : vector<8x128xf32>
    %205 = math.exp %204 : vector<8x128xf32>
    %cst_35 = arith.constant 1.000000e+00 : f32
    %206 = vector.broadcast %cst_35 : f32 to vector<8x128xf32>
    %207 = arith.addf %206, %205 : vector<8x128xf32>
    %208 = arith.divf %206, %207 : vector<8x128xf32>
    %209 = vector.extract_strided_slice %189 {offsets = [0, 256], sizes = [8, 128], strides = [1, 1]} : vector<8x384xf32> to vector<8x128xf32>
    %210 = vector.extract_strided_slice %192 {offsets = [0, 256], sizes = [8, 128], strides = [1, 1]} : vector<8x384xf32> to vector<8x128xf32>
    %211 = arith.mulf %200, %210 : vector<8x128xf32>
    %212 = arith.addf %209, %211 : vector<8x128xf32>
    %213 = math.tanh %212 : vector<8x128xf32>
    %cst_36 = arith.constant 1.000000e+00 : f32
    %214 = vector.broadcast %cst_36 : f32 to vector<8x128xf32>
    %215 = arith.subf %214, %208 : vector<8x128xf32>
    %216 = arith.mulf %215, %213 : vector<8x128xf32>
    %217 = arith.mulf %208, %188 : vector<8x128xf32>
    %218 = arith.addf %216, %217 : vector<8x128xf32>
    %219 = vector.extract_strided_slice %5 {offsets = [56, 0], sizes = [8, 384], strides = [1, 1]} : vector<64x384xf32> to vector<8x384xf32>
    %cst_37 = arith.constant dense<0.000000e+00> : vector<8x384xf32>
    %220 = tpu.matmul %218, %7, %cst_37 {dimension_numbers = #tpu.dot_dimension_numbers<[1], [0], [0], [1], [0, 0, 1, 1], [], []>} : vector<8x128xf32>, vector<128x384xf32>, vector<8x384xf32> -> vector<8x384xf32>
    %221 = vector.broadcast %6 : vector<1x384xf32> to vector<8x384xf32>
    %222 = arith.addf %220, %221 : vector<8x384xf32>
    %223 = vector.extract_strided_slice %219 {offsets = [0, 0], sizes = [8, 128], strides = [1, 1]} : vector<8x384xf32> to vector<8x128xf32>
    %224 = vector.extract_strided_slice %222 {offsets = [0, 0], sizes = [8, 128], strides = [1, 1]} : vector<8x384xf32> to vector<8x128xf32>
    %225 = arith.addf %223, %224 : vector<8x128xf32>
    %226 = arith.negf %225 : vector<8x128xf32>
    %227 = math.exp %226 : vector<8x128xf32>
    %cst_38 = arith.constant 1.000000e+00 : f32
    %228 = vector.broadcast %cst_38 : f32 to vector<8x128xf32>
    %229 = arith.addf %228, %227 : vector<8x128xf32>
    %230 = arith.divf %228, %229 : vector<8x128xf32>
    %231 = vector.extract_strided_slice %219 {offsets = [0, 128], sizes = [8, 128], strides = [1, 1]} : vector<8x384xf32> to vector<8x128xf32>
    %232 = vector.extract_strided_slice %222 {offsets = [0, 128], sizes = [8, 128], strides = [1, 1]} : vector<8x384xf32> to vector<8x128xf32>
    %233 = arith.addf %231, %232 : vector<8x128xf32>
    %234 = arith.negf %233 : vector<8x128xf32>
    %235 = math.exp %234 : vector<8x128xf32>
    %cst_39 = arith.constant 1.000000e+00 : f32
    %236 = vector.broadcast %cst_39 : f32 to vector<8x128xf32>
    %237 = arith.addf %236, %235 : vector<8x128xf32>
    %238 = arith.divf %236, %237 : vector<8x128xf32>
    %239 = vector.extract_strided_slice %219 {offsets = [0, 256], sizes = [8, 128], strides = [1, 1]} : vector<8x384xf32> to vector<8x128xf32>
    %240 = vector.extract_strided_slice %222 {offsets = [0, 256], sizes = [8, 128], strides = [1, 1]} : vector<8x384xf32> to vector<8x128xf32>
    %241 = arith.mulf %230, %240 : vector<8x128xf32>
    %242 = arith.addf %239, %241 : vector<8x128xf32>
    %243 = math.tanh %242 : vector<8x128xf32>
    %cst_40 = arith.constant 1.000000e+00 : f32
    %244 = vector.broadcast %cst_40 : f32 to vector<8x128xf32>
    %245 = arith.subf %244, %238 : vector<8x128xf32>
    %246 = arith.mulf %245, %243 : vector<8x128xf32>
    %247 = arith.mulf %238, %218 : vector<8x128xf32>
    %248 = arith.addf %246, %247 : vector<8x128xf32>
    %249 = vector.extract_strided_slice %248 {offsets = [0, 0], sizes = [4, 128], strides = [1, 1]} : vector<8x128xf32> to vector<4x128xf32>
    %250 = vector.extract_strided_slice %248 {offsets = [4, 0], sizes = [4, 128], strides = [1, 1]} : vector<8x128xf32> to vector<4x128xf32>
    %251 = arith.subf %249, %250 : vector<4x128xf32>
    %252 = arith.mulf %249, %250 : vector<4x128xf32>
    %253 = tpu.concatenate %249, %250, %251, %252 in 1 : vector<4x128xf32>, vector<4x128xf32>, vector<4x128xf32>, vector<4x128xf32> -> vector<4x512xf32>
    %c0_41 = arith.constant 0 : index
    %c0_42 = arith.constant 0 : index
    %254 = vector.load %arg5[%c0_41, %c0_42] : memref<512x128xf32, #tpu.memory_space<vmem>>, vector<512x128xf32>
    %cst_43 = arith.constant dense<0.000000e+00> : vector<4x128xf32>
    %255 = tpu.matmul %253, %254, %cst_43 {dimension_numbers = #tpu.dot_dimension_numbers<[1], [0], [0], [1], [0, 0, 1, 1], [], []>} : vector<4x512xf32>, vector<512x128xf32>, vector<4x128xf32> -> vector<4x128xf32>
    %c0_44 = arith.constant 0 : index
    %c0_45 = arith.constant 0 : index
    %256 = vector.load %arg6[%c0_44, %c0_45] : memref<1x128xf32, #tpu.memory_space<vmem>>, vector<1x128xf32>
    %257 = vector.broadcast %256 : vector<1x128xf32> to vector<4x128xf32>
    %258 = arith.addf %255, %257 : vector<4x128xf32>
    %cst_46 = arith.constant dense<0.000000e+00> : vector<128xf32>
    %259 = vector.multi_reduction <add>, %258, %cst_46 [0] : vector<4x128xf32> to vector<128xf32>
    %260 = vector.shape_cast %259 : vector<128xf32> to vector<1x128xf32>
    %cst_47 = arith.constant 4.000000e+00 : f32
    %261 = vector.broadcast %cst_47 : f32 to vector<1x128xf32>
    %262 = arith.divf %260, %261 : vector<1x128xf32>
    %263 = vector.broadcast %262 : vector<1x128xf32> to vector<4x128xf32>
    %264 = arith.subf %258, %263 : vector<4x128xf32>
    %265 = vector.broadcast %262 : vector<1x128xf32> to vector<4x128xf32>
    %266 = arith.subf %258, %265 : vector<4x128xf32>
    %267 = arith.mulf %264, %266 : vector<4x128xf32>
    %cst_48 = arith.constant dense<0.000000e+00> : vector<128xf32>
    %268 = vector.multi_reduction <add>, %267, %cst_48 [0] : vector<4x128xf32> to vector<128xf32>
    %269 = vector.shape_cast %268 : vector<128xf32> to vector<1x128xf32>
    %cst_49 = arith.constant 4.000000e+00 : f32
    %270 = vector.broadcast %cst_49 : f32 to vector<1x128xf32>
    %271 = arith.divf %269, %270 : vector<1x128xf32>
    %272 = vector.broadcast %262 : vector<1x128xf32> to vector<4x128xf32>
    %273 = arith.subf %258, %272 : vector<4x128xf32>
    %cst_50 = arith.constant 9.99999974E-6 : f32
    %274 = vector.broadcast %cst_50 : f32 to vector<1x128xf32>
    %275 = arith.addf %271, %274 : vector<1x128xf32>
    %276 = math.rsqrt %275 : vector<1x128xf32>
    %277 = vector.broadcast %276 : vector<1x128xf32> to vector<4x128xf32>
    %278 = arith.mulf %273, %277 : vector<4x128xf32>
    %cst_51 = arith.constant 0.000000e+00 : f32
    %279 = vector.broadcast %cst_51 : f32 to vector<4x128xf32>
    %280 = arith.maximumf %278, %279 : vector<4x128xf32>
    %c0_52 = arith.constant 0 : index
    %c0_53 = arith.constant 0 : index
    %281 = vector.load %arg7[%c0_52, %c0_53] : memref<128x2xf32, #tpu.memory_space<vmem>>, vector<128x2xf32>
    %cst_54 = arith.constant dense<0.000000e+00> : vector<4x2xf32>
    %282 = tpu.matmul %280, %281, %cst_54 {dimension_numbers = #tpu.dot_dimension_numbers<[1], [0], [0], [1], [0, 0, 1, 1], [], []>} : vector<4x128xf32>, vector<128x2xf32>, vector<4x2xf32> -> vector<4x2xf32>
    %c0_55 = arith.constant 0 : index
    %c0_56 = arith.constant 0 : index
    %283 = vector.load %arg8[%c0_55, %c0_56] : memref<1x2xf32, #tpu.memory_space<vmem>>, vector<1x2xf32>
    %284 = vector.broadcast %283 : vector<1x2xf32> to vector<4x2xf32>
    %285 = arith.addf %282, %284 : vector<4x2xf32>
    %cst_57 = arith.constant dense<0xFF800000> : vector<4xf32>
    %286 = vector.multi_reduction <maximumf>, %285, %cst_57 [1] : vector<4x2xf32> to vector<4xf32>
    %287 = vector.shape_cast %286 : vector<4xf32> to vector<4x1xf32>
    %288 = vector.broadcast %287 : vector<4x1xf32> to vector<4x2xf32>
    %289 = arith.subf %285, %288 : vector<4x2xf32>
    %290 = math.exp %289 : vector<4x2xf32>
    %cst_58 = arith.constant dense<0.000000e+00> : vector<4xf32>
    %291 = vector.multi_reduction <add>, %290, %cst_58 [1] : vector<4x2xf32> to vector<4xf32>
    %292 = vector.shape_cast %291 : vector<4xf32> to vector<4x1xf32>
    %293 = math.log %292 : vector<4x1xf32>
    %294 = vector.broadcast %293 : vector<4x1xf32> to vector<4x2xf32>
    %295 = arith.subf %289, %294 : vector<4x2xf32>
    %c0_59 = arith.constant 0 : index
    %c0_60 = arith.constant 0 : index
    %296 = vector.load %arg9[%c0_59, %c0_60] : memref<4x2xf32, #tpu.memory_space<vmem>>, vector<4x2xf32>
    tpu.vector_store %arg9[%c0_59, %c0_60], %295 {strides = array<i32>} : memref<4x2xf32, #tpu.memory_space<vmem>>, vector<4x2xf32>,
    return
  }
  func.func @transform_0(%arg0: i32) -> (i32, i32) {
    %c0_i32 = arith.constant 0 : i32
    %c0_i32_0 = arith.constant 0 : i32
    %c0_i32_1 = arith.constant 0 : i32
    return %c0_i32, %c0_i32_0 : i32, i32
  }
  func.func @transform_1(%arg0: i32) -> (i32, i32) {
    %c0_i32 = arith.constant 0 : i32
    %c0_i32_0 = arith.constant 0 : i32
    %c0_i32_1 = arith.constant 0 : i32
    return %c0_i32, %c0_i32_0 : i32, i32
  }
  func.func @transform_2(%arg0: i32) -> (i32, i32) {
    %c0_i32 = arith.constant 0 : i32
    %c0_i32_0 = arith.constant 0 : i32
    %c0_i32_1 = arith.constant 0 : i32
    return %c0_i32, %c0_i32_0 : i32, i32
  }
  func.func @transform_3(%arg0: i32) -> (i32, i32) {
    %c0_i32 = arith.constant 0 : i32
    %c0_i32_0 = arith.constant 0 : i32
    %c0_i32_1 = arith.constant 0 : i32
    return %c0_i32, %c0_i32_0 : i32, i32
  }
  func.func @transform_4(%arg0: i32) -> (i32, i32) {
    %c0_i32 = arith.constant 0 : i32
    %c0_i32_0 = arith.constant 0 : i32
    %c0_i32_1 = arith.constant 0 : i32
    return %c0_i32, %c0_i32_0 : i32, i32
  }
  func.func @transform_5(%arg0: i32) -> (i32, i32) {
    %c0_i32 = arith.constant 0 : i32
    %c0_i32_0 = arith.constant 0 : i32
    %c0_i32_1 = arith.constant 0 : i32
    return %c0_i32, %c0_i32_0 : i32, i32
  }
  func.func @transform_6(%arg0: i32) -> (i32, i32) {
    %c0_i32 = arith.constant 0 : i32
    %c0_i32_0 = arith.constant 0 : i32
    %c0_i32_1 = arith.constant 0 : i32
    return %c0_i32, %c0_i32_0 : i32, i32
  }
  func.func @transform_7(%arg0: i32) -> (i32, i32) {
    %c0_i32 = arith.constant 0 : i32
    %c0_i32_0 = arith.constant 0 : i32
    %c0_i32_1 = arith.constant 0 : i32
    return %c0_i32, %c0_i32_0 : i32, i32
  }
  func.func @transform_8(%arg0: i32) -> (i32, i32) {
    %c0_i32 = arith.constant 0 : i32
    %c0_i32_0 = arith.constant 0 : i32
    %c0_i32_1 = arith.constant 0 : i32
    return %c0_i32, %c0_i32_0 : i32, i32
  }
}

</mosaic_0001>

<llo_original>
// kernel: model_forward.1
$region0: #{model_forward.1}
  #allocation0 [shape = 'u32[]', space=smem, size = 0x4, offset = 0x4, fixed_abs, tag = 'smem constant byte address 0x4 - core index']
  #allocation1 [shape = 'u32[144,128]{1,0:T(1,128)}', space=vmem, size = 0x12000, scoped, tag = 'internal scratch']
  %s0 = inlined_call_operand.vmem [shape: f32[64,32], index: 0, kind: input, shape index: {}]
  %s1 = inlined_call_operand.vmem [shape: f32[32,384], index: 1, kind: input, shape index: {}]
  %s2 = inlined_call_operand.hbm [shape: f32[128,384], index: 2, kind: input, shape index: {}]
  %s3 = inlined_call_operand.vmem [shape: f32[2,384], index: 3, kind: input, shape index: {}]
  %s4 = inlined_call_operand.hbm [shape: f32[512,128], index: 4, kind: input, shape index: {}]
  %s5 = inlined_call_operand.vmem [shape: f32[1,128], index: 5, kind: input, shape index: {}]
  %s6 = inlined_call_operand.vmem [shape: f32[128,2], index: 6, kind: input, shape index: {}]
  %s7 = inlined_call_operand.vmem [shape: f32[1,2], index: 7, kind: input, shape index: {}]
  %s8 = inlined_call_operand.vmem [shape: f32[4,2], index: 8, kind: output, shape index: {}]
  %s9 = sld [smem:[#allocation0]]
  $region50: #{model_forward.1} parent=0
    _
  %s11 = ssub.s32 1, %s9
  %s12 = scalar_select 0, %s11, %s9
  $region1: #{model_forward.1} parent=0
    #allocation2 [shape = 'u8[196608]{0}', space=vmem, size = 0x30000, scoped, tag = 'input window, operand 2, single buffered']
    #allocation3 [shape = 's32[1]{0}', space=sflag, size = 0x4, scoped, tag = 'scoped memory for model_forward.1']
    #allocation4 [shape = 'u8[262144]{0}', space=vmem, size = 0x40000, scoped, tag = 'input window, operand 4, single buffered']
    #allocation5 [shape = 's32[1]{0}', space=sflag, size = 0x4, scoped, tag = 'scoped memory for model_forward.1']
    %13 = vsyncpa [#allocation3], 0
    %14 = vsyncpa [#allocation5], 0
    // Predicated region
    $region2: #{model_forward.1} parent=1 // pred_check
      _
    $region3: #{model_forward.1} parent=1 // pred_check_branch
      %16 = sbr.rel (0) target = $region5
    $region4: #{model_forward.1} parent=1 // pred_region
      _
    $region5: #{model_forward.1} parent=1 // pred_fallthru
      _
    // Predicated region
    $region6: #{model_forward.1} parent=1 // pred_check
      _
    $region7: #{model_forward.1} parent=1 // pred_check_branch
      %18 = sbr.rel (0) target = $region9
    $region8: #{model_forward.1} parent=1 // pred_region
      _
    $region9: #{model_forward.1} parent=1 // pred_fallthru
      _
    // Predicated region
    $region10: #{model_forward.1} parent=1 // pred_check
      _
    $region11: #{model_forward.1} parent=1 // pred_check_branch
      %20 = sbr.rel (0) target = $region13
    $region12: #{model_forward.1} parent=1 // pred_region
      %s22 = ssub.s32 6144, 6144
      %23 = vsyncadd [#allocation3], %s22
      %s24 = sshll.u32 [#allocation2], 4
      %s25 = int_to_ptr.vmem [resolvable:$true] %s24
      %30 = dma.hbm_to_vmem [thread:$0]  %s2, 6144, %s25, [#allocation3], 384, 384, 24
    $region13: #{model_forward.1} parent=1 // pred_fallthru
      _
    // Predicated region
    $region14: #{model_forward.1} parent=1 // pred_check
      _
    $region15: #{model_forward.1} parent=1 // pred_check_branch
      %32 = sbr.rel (0) target = $region17
    $region16: #{model_forward.1} parent=1 // pred_region
      _
    $region17: #{model_forward.1} parent=1 // pred_fallthru
      _
    // Predicated region
    $region18: #{model_forward.1} parent=1 // pred_check
      _
    $region19: #{model_forward.1} parent=1 // pred_check_branch
      %34 = sbr.rel (0) target = $region21
    $region20: #{model_forward.1} parent=1 // pred_region
      %s36 = ssub.s32 8192, 8192
      %37 = vsyncadd [#allocation5], %s36
      %s38 = sshll.u32 [#allocation4], 4
      %s39 = int_to_ptr.vmem [resolvable:$true] %s38
      %44 = dma.hbm_to_vmem [thread:$0]  %s4, 8192, %s39, [#allocation5], 128, 128, 8
    $region21: #{model_forward.1} parent=1 // pred_fallthru
      _
    // Predicated region
    $region22: #{model_forward.1} parent=1 // pred_check
      _
    $region23: #{model_forward.1} parent=1 // pred_check_branch
      %46 = sbr.rel (0) target = $region25
    $region24: #{model_forward.1} parent=1 // pred_region
      _
    $region25: #{model_forward.1} parent=1 // pred_fallthru
      _
    // Predicated region
    $region26: #{model_forward.1} parent=1 // pred_check
      _
    $region27: #{model_forward.1} parent=1 // pred_check_branch
      %48 = sbr.rel (0) target = $region29
    $region28: #{model_forward.1} parent=1 // pred_region
      _
    $region29: #{model_forward.1} parent=1 // pred_fallthru
      _
    // Predicated region
    $region30: #{model_forward.1} parent=1 // pred_check
      _
    $region31: #{model_forward.1} parent=1 // pred_check_branch
      %50 = sbr.rel (0) target = $region33
    $region32: #{model_forward.1} parent=1 // pred_region
      _
    $region33: #{model_forward.1} parent=1 // pred_fallthru
      _
    // Predicated region
    $region34: #{model_forward.1} parent=1 // pred_check
      _
    $region35: #{model_forward.1} parent=1 // pred_check_branch
      %52 = sbr.rel (0) target = $region37
    $region36: #{model_forward.1} parent=1 // pred_region
      %53 = dma.done [#allocation3], 6144
    $region37: #{model_forward.1} parent=1 // pred_fallthru
      _
    // Predicated region
    $region38: #{model_forward.1} parent=1 // pred_check
      _
    $region39: #{model_forward.1} parent=1 // pred_check_branch
      %55 = sbr.rel (0) target = $region41
    $region40: #{model_forward.1} parent=1 // pred_region
      %56 = dma.done [#allocation5], 8192
    $region41: #{model_forward.1} parent=1 // pred_fallthru
      _
    %v57 = vld [vmem:[%s0] sm:$0xff]
    %v58 = vld [vmem:[%s0 + $0x8] sm:$0xff]
    %v59 = vld [vmem:[%s0 + $0x10] sm:$0xff]
    %v60 = vld [vmem:[%s0 + $0x18] sm:$0xff]
    %v61 = vld [vmem:[%s0 + $0x20] sm:$0xff]
    %v62 = vld [vmem:[%s0 + $0x28] sm:$0xff]
    %v63 = vld [vmem:[%s0 + $0x30] sm:$0xff]
    %v64 = vld [vmem:[%s0 + $0x38] sm:$0xff]
    %v65 = vld [vmem:[%s1] sm:$0xff]
    %v66 = vld [vmem:[%s1 + $0x8] sm:$0xff]
    %v67 = vld [vmem:[%s1 + $0x10] sm:$0xff]
    %v68 = vld [vmem:[%s1 + $0x18] sm:$0xff]
    %v69 = vld [vmem:[%s1 + $0x20] sm:$0xff]
    %v70 = vld [vmem:[%s1 + $0x28] sm:$0xff]
    %v71 = vld [vmem:[%s1 + $0x30] sm:$0xff]
    %v72 = vld [vmem:[%s1 + $0x38] sm:$0xff]
    %v73 = vld [vmem:[%s1 + $0x40] sm:$0xff]
    %v74 = vld [vmem:[%s1 + $0x48] sm:$0xff]
    %v75 = vld [vmem:[%s1 + $0x50] sm:$0xff]
    %v76 = vld [vmem:[%s1 + $0x58] sm:$0xff]
    %v77 = vld [vmem:[%s3] ss:$2 sm:$0x7]
    %v79 = vlaneseq
    %v80 = vshrl.u32 %v79, 7
    %v81 = vsub.s32 0, %v80
    %v82 = vrot.slane %v77, %v81
    %v83 = vlaneseq
    %v84 = vshrl.u32 %v83, 7
    %v85 = vsub.s32 1, %v84
    %v86 = vrot.slane %v77, %v85
    %v87 = vlaneseq
    %v88 = vshrl.u32 %v87, 7
    %v89 = vsub.s32 2, %v88
    %v90 = vrot.slane %v77, %v89
    %vm94 = vcmask 261120
    %v96 = vsel %vm94, %v57, 0
    %v99 = vsel %vm94, %v58, 0
    %v102 = vsel %vm94, %v59, 0
    %v105 = vsel %vm94, %v60, 0
    %v108 = vsel %vm94, %v61, 0
    %v111 = vsel %vm94, %v62, 0
    %v114 = vsel %vm94, %v63, 0
    %v117 = vsel %vm94, %v64, 0
    %119 = vmatprep.subr.mxu0 %v66
    %120 = vmatpush1.msra.mxu0 %v65
    %121 = vmatprep.subr.mxu0 %v69
    %122 = vmatpush1.msra.mxu0 %v68
    %123 = vmatprep.subr.mxu0 %v72
    %124 = vmatpush1.msra.mxu0 %v71
    %125 = vmatprep.subr.mxu0 %v75
    %126 = vmatpush1.msra.mxu0 %v74
    %127 = vmatprep.subr.mxu0 0.0
    %128 = vmatpush1.msra.mxu0 0.0
    %129 = vmatprep.subr.mxu0 0.0
    %130 = vmatpush1.msra.mxu0 0.0
    %131 = vmatprep.subr.mxu0 0.0
    %132 = vmatpush1.msra.mxu0 0.0
    %133 = vmatprep.subr.mxu0 0.0
    %134 = vmatpush1.msra.mxu0 0.0
    %135 = vmatprep.subr.mxu0 0.0
    %136 = vmatpush1.msra.mxu0 0.0
    %137 = vmatprep.subr.mxu0 0.0
    %138 = vmatpush1.msra.mxu0 0.0
    %139 = vmatprep.subr.mxu0 0.0
    %140 = vmatpush1.msra.mxu0 0.0
    %141 = vmatprep.subr.mxu0 0.0
    %142 = vmatpush1.msra.mxu0 0.0
    %143 = vmatprep.subr.mxu0 0.0
    %144 = vmatpush1.msra.mxu0 0.0
    %145 = vmatprep.subr.mxu0 0.0
    %146 = vmatpush1.msra.mxu0 0.0
    %147 = vmatprep.subr.mxu0 0.0
    %148 = vmatpush1.msra.mxu0 0.0
    %149 = vmatprep.subr.mxu0 0.0
    %150 = vmatpush1.msra.mxu0 0.0
    %151 = vmatprep.subr.mxu0 0.0
    %152 = vmatpush1.msra.mxu0 0.0
    %153 = vmatprep.subr.mxu0 0.0
    %154 = vmatpush1.msra.mxu0 0.0
    %155 = vmatprep.subr.mxu0 0.0
    %156 = vmatpush1.msra.mxu0 0.0
    %157 = vmatprep.subr.mxu0 0.0
    %158 = vmatpush1.msra.mxu0 0.0
    %159 = vmatprep.subr.mxu0 0.0
    %160 = vmatpush1.msra.mxu0 0.0
    %161 = vmatprep.subr.mxu0 0.0
    %162 = vmatpush1.msra.mxu0 0.0
    %163 = vmatprep.subr.mxu0 0.0
    %164 = vmatpush1.msra.mxu0 0.0
    %165 = vmatprep.subr.mxu0 0.0
    %166 = vmatpush1.msra.mxu0 0.0
    %167 = vmatprep.subr.mxu0 0.0
    %168 = vmatpush1.msra.mxu0 0.0
    %169 = vmatprep.subr.mxu0 0.0
    %170 = vmatpush1.msra.mxu0 0.0
    %171 = vmatprep.subr.mxu0 0.0
    %172 = vmatpush1.msra.mxu0 0.0
    %173 = vmatprep.subr.mxu0 0.0
    %174 = vmatpush1.msra.mxu0 0.0
    %175 = vmatprep.subr.mxu0 0.0
    %176 = vmatpush1.msra.mxu0 0.0
    %177 = vmatprep.subr.mxu0 0.0
    %178 = vmatpush1.msra.mxu0 0.0
    %179 = vmatprep.subr.mxu0 0.0
    %180 = vmatpush1.msra.mxu0 0.0
    %181 = vmatprep.subr.mxu0 0.0
    %182 = vmatpush1.msra.mxu0 0.0
    %183 = vmatprep.mubr.f32.mxu0 0.0
    %184 = vmatmul.mubr.f32.gmra.mrb[0].mxu0 %v96
    %v185 = vpop.f32.mrb[0].mxu0
    %v186 = vadd.f32 %v82, %v185
    %v187 = vpop.f32.mrb[0].mxu0
    %v188 = vadd.f32 %v86, %v187
    %189 = vmatprep.mubr.f32.mxu0 0.0
    %190 = vmatmul.mubr.f32.gmra.mrb[0].mxu0 %v99
    %v191 = vpop.f32.mrb[0].mxu0
    %v192 = vadd.f32 %v82, %v191
    %v193 = vpop.f32.mrb[0].mxu0
    %v194 = vadd.f32 %v86, %v193
    %195 = vmatprep.mubr.f32.mxu0 0.0
    %196 = vmatmul.mubr.f32.gmra.mrb[0].mxu0 %v102
    %v197 = vpop.f32.mrb[0].mxu0
    %v198 = vadd.f32 %v82, %v197
    %v199 = vpop.f32.mrb[0].mxu0
    %v200 = vadd.f32 %v86, %v199
    %201 = vmatprep.mubr.f32.mxu0 0.0
    %202 = vmatmul.mubr.f32.gmra.mrb[0].mxu0 %v105
    %v203 = vpop.f32.mrb[0].mxu0
    %v204 = vadd.f32 %v82, %v203
    %v205 = vpop.f32.mrb[0].mxu0
    %v206 = vadd.f32 %v86, %v205
    %207 = vmatprep.mubr.f32.mxu0 0.0
    %208 = vmatmul.mubr.f32.gmra.mrb[0].mxu0 %v108
    %v209 = vpop.f32.mrb[0].mxu0
    %v210 = vadd.f32 %v82, %v209
    %v211 = vpop.f32.mrb[0].mxu0
    %v212 = vadd.f32 %v86, %v211
    %213 = vmatprep.mubr.f32.mxu0 0.0
    %214 = vmatmul.mubr.f32.gmra.mrb[0].mxu0 %v111
    %v215 = vpop.f32.mrb[0].mxu0
    %v216 = vadd.f32 %v82, %v215
    %v217 = vpop.f32.mrb[0].mxu0
    %v218 = vadd.f32 %v86, %v217
    %219 = vmatprep.mubr.f32.mxu0 0.0
    %220 = vmatmul.mubr.f32.gmra.mrb[0].mxu0 %v114
    %v221 = vpop.f32.mrb[0].mxu0
    %v222 = vadd.f32 %v82, %v221
    %v223 = vpop.f32.mrb[0].mxu0
    %v224 = vadd.f32 %v86, %v223
    %225 = vmatprep.mubr.f32.mxu0 0.0
    %226 = vmatmul.mubr.f32.gmra.mrb[0].mxu0 %v117
    %v227 = vpop.f32.mrb[0].mxu0
    %v228 = vadd.f32 %v82, %v227
    %v229 = vpop.f32.mrb[0].mxu0
    %v230 = vadd.f32 %v86, %v229
    %231 = vdwg.mxu0
    %232 = vmatprep.subr.mxu0 0.0
    %233 = vmatpush1.msra.mxu0 %v67
    %234 = vmatprep.subr.mxu0 0.0
    %235 = vmatpush1.msra.mxu0 %v70
    %236 = vmatprep.subr.mxu0 0.0
    %237 = vmatpush1.msra.mxu0 %v73
    %238 = vmatprep.subr.mxu0 0.0
    %239 = vmatpush1.msra.mxu0 %v76
    %240 = vmatprep.subr.mxu0 0.0
    %241 = vmatpush1.msra.mxu0 0.0
    %242 = vmatprep.subr.mxu0 0.0
    %243 = vmatpush1.msra.mxu0 0.0
    %244 = vmatprep.subr.mxu0 0.0
    %245 = vmatpush1.msra.mxu0 0.0
    %246 = vmatprep.subr.mxu0 0.0
    %247 = vmatpush1.msra.mxu0 0.0
    %248 = vmatprep.subr.mxu0 0.0
    %249 = vmatpush1.msra.mxu0 0.0
    %250 = vmatprep.subr.mxu0 0.0
    %251 = vmatpush1.msra.mxu0 0.0
    %252 = vmatprep.subr.mxu0 0.0
    %253 = vmatpush1.msra.mxu0 0.0
    %254 = vmatprep.subr.mxu0 0.0
    %255 = vmatpush1.msra.mxu0 0.0
    %256 = vmatprep.subr.mxu0 0.0
    %257 = vmatpush1.msra.mxu0 0.0
    %258 = vmatprep.subr.mxu0 0.0
    %259 = vmatpush1.msra.mxu0 0.0
    %260 = vmatprep.subr.mxu0 0.0
    %261 = vmatpush1.msra.mxu0 0.0
    %262 = vmatprep.subr.mxu0 0.0
    %263 = vmatpush1.msra.mxu0 0.0
    %264 = vmatprep.subr.mxu0 0.0
    %265 = vmatpush1.msra.mxu0 0.0
    %266 = vmatprep.subr.mxu0 0.0
    %267 = vmatpush1.msra.mxu0 0.0
    %268 = vmatprep.subr.mxu0 0.0
    %269 = vmatpush1.msra.mxu0 0.0
    %270 = vmatprep.subr.mxu0 0.0
    %271 = vmatpush1.msra.mxu0 0.0
    %272 = vmatprep.subr.mxu0 0.0
    %273 = vmatpush1.msra.mxu0 0.0
    %274 = vmatprep.subr.mxu0 0.0
    %275 = vmatpush1.msra.mxu0 0.0
    %276 = vmatprep.subr.mxu0 0.0
    %277 = vmatpush1.msra.mxu0 0.0
    %278 = vmatprep.subr.mxu0 0.0
    %279 = vmatpush1.msra.mxu0 0.0
    %280 = vmatprep.subr.mxu0 0.0
    %281 = vmatpush1.msra.mxu0 0.0
    %282 = vmatprep.subr.mxu0 0.0
    %283 = vmatpush1.msra.mxu0 0.0
    %284 = vmatprep.subr.mxu0 0.0
    %285 = vmatpush1.msra.mxu0 0.0
    %286 = vmatprep.subr.mxu0 0.0
    %287 = vmatpush1.msra.mxu0 0.0
    %288 = vmatprep.subr.mxu0 0.0
    %289 = vmatpush1.msra.mxu0 0.0
    %290 = vmatprep.subr.mxu0 0.0
    %291 = vmatpush1.msra.mxu0 0.0
    %292 = vmatprep.subr.mxu0 0.0
    %293 = vmatpush1.msra.mxu0 0.0
    %294 = vmatprep.subr.mxu0 0.0
    %295 = vmatpush1.msra.mxu0 0.0
    %296 = vmatprep.mubr.f32.mxu0 0.0
    %297 = vmatmul.mubr.f32.gmra.mrb[0].mxu0 %v96
    %v298 = vpop.f32.mrb[0].mxu0
    %v299 = vadd.f32 %v90, %v298
    %v300 = vpop.f32.mrb[0].mxu0
    %301 = vmatprep.mubr.f32.mxu0 0.0
    %302 = vmatmul.mubr.f32.gmra.mrb[0].mxu0 %v99
    %v303 = vpop.f32.mrb[0].mxu0
    %v304 = vadd.f32 %v90, %v303
    %v305 = vpop.f32.mrb[0].mxu0
    %306 = vmatprep.mubr.f32.mxu0 0.0
    %307 = vmatmul.mubr.f32.gmra.mrb[0].mxu0 %v102
    %v308 = vpop.f32.mrb[0].mxu0
    %v309 = vadd.f32 %v90, %v308
    %v310 = vpop.f32.mrb[0].mxu0
    %311 = vmatprep.mubr.f32.mxu0 0.0
    %312 = vmatmul.mubr.f32.gmra.mrb[0].mxu0 %v105
    %v313 = vpop.f32.mrb[0].mxu0
    %v314 = vadd.f32 %v90, %v313
    %v315 = vpop.f32.mrb[0].mxu0
    %316 = vmatprep.mubr.f32.mxu0 0.0
    %317 = vmatmul.mubr.f32.gmra.mrb[0].mxu0 %v108
    %v318 = vpop.f32.mrb[0].mxu0
    %v319 = vadd.f32 %v90, %v318
    %v320 = vpop.f32.mrb[0].mxu0
    %321 = vmatprep.mubr.f32.mxu0 0.0
    %322 = vmatmul.mubr.f32.gmra.mrb[0].mxu0 %v111
    %v323 = vpop.f32.mrb[0].mxu0
    %v324 = vadd.f32 %v90, %v323
    %v325 = vpop.f32.mrb[0].mxu0
    %326 = vmatprep.mubr.f32.mxu0 0.0
    %327 = vmatmul.mubr.f32.gmra.mrb[0].mxu0 %v114
    %v328 = vpop.f32.mrb[0].mxu0
    %v329 = vadd.f32 %v90, %v328
    %v330 = vpop.f32.mrb[0].mxu0
    %331 = vmatprep.mubr.f32.mxu0 0.0
    %332 = vmatmul.mubr.f32.gmra.mrb[0].mxu0 %v117
    %v333 = vpop.f32.mrb[0].mxu0
    %v334 = vadd.f32 %v90, %v333
    %v335 = vpop.f32.mrb[0].mxu0
    %336 = vdwg.mxu0
    %s337 = scalar_lea.vmem %s3, 1
    %v338 = vld [vmem:[%s337] ss:$2 sm:$0x7]
    %v339 = vld [vmem:[#allocation2] sm:$0xff]
    %v340 = vld [vmem:[#allocation2 + $0x8] sm:$0xff]
    %v341 = vld [vmem:[#allocation2 + $0x10] sm:$0xff]
    %v342 = vld [vmem:[#allocation2 + $0x18] sm:$0xff]
    %v343 = vld [vmem:[#allocation2 + $0x20] sm:$0xff]
    %v344 = vld [vmem:[#allocation2 + $0x28] sm:$0xff]
    %v345 = vld [vmem:[#allocation2 + $0x30] sm:$0xff]
    %v346 = vld [vmem:[#allocation2 + $0x38] sm:$0xff]
    %v347 = vld [vmem:[#allocation2 + $0x40] sm:$0xff]
    %v348 = vld [vmem:[#allocation2 + $0x48] sm:$0xff]
    %v349 = vld [vmem:[#allocation2 + $0x50] sm:$0xff]
    %v350 = vld [vmem:[#allocation2 + $0x58] sm:$0xff]
    %v351 = vld [vmem:[#allocation2 + $0x60] sm:$0xff]
    %v352 = vld [vmem:[#allocation2 + $0x68] sm:$0xff]
    %v353 = vld [vmem:[#allocation2 + $0x70] sm:$0xff]
    %v354 = vld [vmem:[#allocation2 + $0x78] sm:$0xff]
    %v355 = vld [vmem:[#allocation2 + $0x80] sm:$0xff]
    %v356 = vld [vmem:[#allocation2 + $0x88] sm:$0xff]
    %v357 = vld [vmem:[#allocation2 + $0x90] sm:$0xff]
    %v358 = vld [vmem:[#allocation2 + $0x98] sm:$0xff]
    %v359 = vld [vmem:[#allocation2 + $0xa0] sm:$0xff]
    %v360 = vld [vmem:[#allocation2 + $0xa8] sm:$0xff]
    %v361 = vld [vmem:[#allocation2 + $0xb0] sm:$0xff]
    %v362 = vld [vmem:[#allocation2 + $0xb8] sm:$0xff]
    %v363 = vld [vmem:[#allocation2 + $0xc0] sm:$0xff]
    %v364 = vld [vmem:[#allocation2 + $0xc8] sm:$0xff]
    %v365 = vld [vmem:[#allocation2 + $0xd0] sm:$0xff]
    %v366 = vld [vmem:[#allocation2 + $0xd8] sm:$0xff]
    %v367 = vld [vmem:[#allocation2 + $0xe0] sm:$0xff]
    %v368 = vld [vmem:[#allocation2 + $0xe8] sm:$0xff]
    %v369 = vld [vmem:[#allocation2 + $0xf0] sm:$0xff]
    %v370 = vld [vmem:[#allocation2 + $0xf8] sm:$0xff]
    %v371 = vld [vmem:[#allocation2 + $0x100] sm:$0xff]
    %v372 = vld [vmem:[#allocation2 + $0x108] sm:$0xff]
    %v373 = vld [vmem:[#allocation2 + $0x110] sm:$0xff]
    %v374 = vld [vmem:[#allocation2 + $0x118] sm:$0xff]
    %v375 = vld [vmem:[#allocation2 + $0x120] sm:$0xff]
    %v376 = vld [vmem:[#allocation2 + $0x128] sm:$0xff]
    %v377 = vld [vmem:[#allocation2 + $0x130] sm:$0xff]
    %v378 = vld [vmem:[#allocation2 + $0x138] sm:$0xff]
    %v379 = vld [vmem:[#allocation2 + $0x140] sm:$0xff]
    %v380 = vld [vmem:[#allocation2 + $0x148] sm:$0xff]
    %v381 = vld [vmem:[#allocation2 + $0x150] sm:$0xff]
    %v382 = vld [vmem:[#allocation2 + $0x158] sm:$0xff]
    %v383 = vld [vmem:[#allocation2 + $0x160] sm:$0xff]
    %v384 = vld [vmem:[#allocation2 + $0x168] sm:$0xff]
    %v385 = vld [vmem:[#allocation2 + $0x170] sm:$0xff]
    %v386 = vld [vmem:[#allocation2 + $0x178] sm:$0xff]
    %v388 = vlaneseq
    %v389 = vshrl.u32 %v388, 7
    %v390 = vsub.s32 0, %v389
    %v391 = vrot.slane %v338, %v390
    %v392 = vlaneseq
    %v393 = vshrl.u32 %v392, 7
    %v394 = vsub.s32 1, %v393
    %v395 = vrot.slane %v338, %v394
    %v396 = vlaneseq
    %v397 = vshrl.u32 %v396, 7
    %v398 = vsub.s32 2, %v397
    %v399 = vrot.slane %v338, %v398
    %403 = vmatprep.subr.mxu0 %v340
    %404 = vmatpush1.msra.mxu0 %v339
    %405 = vmatprep.subr.mxu0 %v343
    %406 = vmatpush1.msra.mxu0 %v342
    %407 = vmatprep.subr.mxu0 %v346
    %408 = vmatpush1.msra.mxu0 %v345
    %409 = vmatprep.subr.mxu0 %v349
    %410 = vmatpush1.msra.mxu0 %v348
    %411 = vmatprep.subr.mxu0 %v352
    %412 = vmatpush1.msra.mxu0 %v351
    %413 = vmatprep.subr.mxu0 %v355
    %414 = vmatpush1.msra.mxu0 %v354
    %415 = vmatprep.subr.mxu0 %v358
    %416 = vmatpush1.msra.mxu0 %v357
    %417 = vmatprep.subr.mxu0 %v361
    %418 = vmatpush1.msra.mxu0 %v360
    %419 = vmatprep.subr.mxu0 %v364
    %420 = vmatpush1.msra.mxu0 %v363
    %421 = vmatprep.subr.mxu0 %v367
    %422 = vmatpush1.msra.mxu0 %v366
    %423 = vmatprep.subr.mxu0 %v370
    %424 = vmatpush1.msra.mxu0 %v369
    %425 = vmatprep.subr.mxu0 %v373
    %426 = vmatpush1.msra.mxu0 %v372
    %427 = vmatprep.subr.mxu0 %v376
    %428 = vmatpush1.msra.mxu0 %v375
    %429 = vmatprep.subr.mxu0 %v379
    %430 = vmatpush1.msra.mxu0 %v378
    %431 = vmatprep.subr.mxu0 %v382
    %432 = vmatpush1.msra.mxu0 %v381
    %433 = vmatprep.subr.mxu0 %v385
    %434 = vmatpush1.msra.mxu0 %v384
    %435 = vmatprep.subr.mxu0 0.0
    %436 = vmatpush1.msra.mxu0 0.0
    %437 = vmatprep.subr.mxu0 0.0
    %438 = vmatpush1.msra.mxu0 0.0
    %439 = vmatprep.subr.mxu0 0.0
    %440 = vmatpush1.msra.mxu0 0.0
    %441 = vmatprep.subr.mxu0 0.0
    %442 = vmatpush1.msra.mxu0 0.0
    %443 = vmatprep.subr.mxu0 0.0
    %444 = vmatpush1.msra.mxu0 0.0
    %445 = vmatprep.subr.mxu0 0.0
    %446 = vmatpush1.msra.mxu0 0.0
    %447 = vmatprep.subr.mxu0 0.0
    %448 = vmatpush1.msra.mxu0 0.0
    %449 = vmatprep.subr.mxu0 0.0
    %450 = vmatpush1.msra.mxu0 0.0
    %451 = vmatprep.subr.mxu0 0.0
    %452 = vmatpush1.msra.mxu0 0.0
    %453 = vmatprep.subr.mxu0 0.0
    %454 = vmatpush1.msra.mxu0 0.0
    %455 = vmatprep.subr.mxu0 0.0
    %456 = vmatpush1.msra.mxu0 0.0
    %457 = vmatprep.subr.mxu0 0.0
    %458 = vmatpush1.msra.mxu0 0.0
    %459 = vmatprep.subr.mxu0 0.0
    %460 = vmatpush1.msra.mxu0 0.0
    %461 = vmatprep.subr.mxu0 0.0
    %462 = vmatpush1.msra.mxu0 0.0
    %463 = vmatprep.subr.mxu0 0.0
    %464 = vmatpush1.msra.mxu0 0.0
    %465 = vmatprep.subr.mxu0 0.0
    %466 = vmatpush1.msra.mxu0 0.0
    %467 = vmatprep.mubr.f32.mxu0 0.0
    %468 = vmatmul.mubr.f32.gmra.mrb[0].mxu0 0.0
    %v469 = vpop.f32.mrb[0].mxu0
    %v470 = vadd.f32 %v391, %v469
    %v471 = vpop.f32.mrb[0].mxu0
    %v472 = vadd.f32 %v395, %v471
    %473 = vdwg.mxu0
    %474 = vmatprep.subr.mxu0 0.0
    %475 = vmatpush1.msra.mxu0 %v341
    %476 = vmatprep.subr.mxu0 0.0
    %477 = vmatpush1.msra.mxu0 %v344
    %478 = vmatprep.subr.mxu0 0.0
    %479 = vmatpush1.msra.mxu0 %v347
    %480 = vmatprep.subr.mxu0 0.0
    %481 = vmatpush1.msra.mxu0 %v350
    %482 = vmatprep.subr.mxu0 0.0
    %483 = vmatpush1.msra.mxu0 %v353
    %484 = vmatprep.subr.mxu0 0.0
    %485 = vmatpush1.msra.mxu0 %v356
    %486 = vmatprep.subr.mxu0 0.0
    %487 = vmatpush1.msra.mxu0 %v359
    %488 = vmatprep.subr.mxu0 0.0
    %489 = vmatpush1.msra.mxu0 %v362
    %490 = vmatprep.subr.mxu0 0.0
    %491 = vmatpush1.msra.mxu0 %v365
    %492 = vmatprep.subr.mxu0 0.0
    %493 = vmatpush1.msra.mxu0 %v368
    %494 = vmatprep.subr.mxu0 0.0
    %495 = vmatpush1.msra.mxu0 %v371
    %496 = vmatprep.subr.mxu0 0.0
    %497 = vmatpush1.msra.mxu0 %v374
    %498 = vmatprep.subr.mxu0 0.0
    %499 = vmatpush1.msra.mxu0 %v377
    %500 = vmatprep.subr.mxu0 0.0
    %501 = vmatpush1.msra.mxu0 %v380
    %502 = vmatprep.subr.mxu0 0.0
    %503 = vmatpush1.msra.mxu0 %v383
    %504 = vmatprep.subr.mxu0 0.0
    %505 = vmatpush1.msra.mxu0 %v386
    %506 = vmatprep.subr.mxu0 0.0
    %507 = vmatpush1.msra.mxu0 0.0
    %508 = vmatprep.subr.mxu0 0.0
    %509 = vmatpush1.msra.mxu0 0.0
    %510 = vmatprep.subr.mxu0 0.0
    %511 = vmatpush1.msra.mxu0 0.0
    %512 = vmatprep.subr.mxu0 0.0
    %513 = vmatpush1.msra.mxu0 0.0
    %514 = vmatprep.subr.mxu0 0.0
    %515 = vmatpush1.msra.mxu0 0.0
    %516 = vmatprep.subr.mxu0 0.0
    %517 = vmatpush1.msra.mxu0 0.0
    %518 = vmatprep.subr.mxu0 0.0
    %519 = vmatpush1.msra.mxu0 0.0
    %520 = vmatprep.subr.mxu0 0.0
    %521 = vmatpush1.msra.mxu0 0.0
    %522 = vmatprep.subr.mxu0 0.0
    %523 = vmatpush1.msra.mxu0 0.0
    %524 = vmatprep.subr.mxu0 0.0
    %525 = vmatpush1.msra.mxu0 0.0
    %526 = vmatprep.subr.mxu0 0.0
    %527 = vmatpush1.msra.mxu0 0.0
    %528 = vmatprep.subr.mxu0 0.0
    %529 = vmatpush1.msra.mxu0 0.0
    %530 = vmatprep.subr.mxu0 0.0
    %531 = vmatpush1.msra.mxu0 0.0
    %532 = vmatprep.subr.mxu0 0.0
    %533 = vmatpush1.msra.mxu0 0.0
    %534 = vmatprep.subr.mxu0 0.0
    %535 = vmatpush1.msra.mxu0 0.0
    %536 = vmatprep.subr.mxu0 0.0
    %537 = vmatpush1.msra.mxu0 0.0
    %538 = vmatprep.mubr.f32.mxu0 0.0
    %539 = vmatmul.mubr.f32.gmra.mrb[0].mxu0 0.0
    %v540 = vpop.f32.mrb[0].mxu0
    %v541 = vadd.f32 %v399, %v540
    %v542 = vpop.f32.mrb[0].mxu0
    %543 = vdwg.mxu0
    %v544 = vadd.f32 %v186, %v470
    %v545 = vxor.u32 %v544, 2147483648
    %v546 = vmul.f32 %v545, 1.442695
    %v547 = vpow.pop %v546
    %v548 = vadd.f32 %v547, 1.0
    %v549 = vrcp.pop %v548
    %v550 = vmul.f32 1.0, %v549
    %v551 = vadd.f32 %v188, %v472
    %v552 = vxor.u32 %v551, 2147483648
    %v553 = vmul.f32 %v552, 1.442695
    %v554 = vpow.pop %v553
    %v555 = vadd.f32 %v554, 1.0
    %v556 = vrcp.pop %v555
    %v557 = vmul.f32 1.0, %v556
    %v558 = vmul.f32 %v550, %v541
    %v559 = vadd.f32 %v299, %v558
    %v560 = vtanh.pop %v559
    %v561 = vsub.f32 1.0, %v557
    %v562 = vmul.f32 %v561, %v560
    %v563 = vmul.f32 %v557, 0.0
    %v564 = vadd.f32 %v562, %v563
    %565 = vmatprep.subr.mxu0 %v340
    %566 = vmatpush1.msra.mxu0 %v339
    %567 = vmatprep.subr.mxu0 %v343
    %568 = vmatpush1.msra.mxu0 %v342
    %569 = vmatprep.subr.mxu0 %v346
    %570 = vmatpush1.msra.mxu0 %v345
    %571 = vmatprep.subr.mxu0 %v349
    %572 = vmatpush1.msra.mxu0 %v348
    %573 = vmatprep.subr.mxu0 %v352
    %574 = vmatpush1.msra.mxu0 %v351
    %575 = vmatprep.subr.mxu0 %v355
    %576 = vmatpush1.msra.mxu0 %v354
    %577 = vmatprep.subr.mxu0 %v358
    %578 = vmatpush1.msra.mxu0 %v357
    %579 = vmatprep.subr.mxu0 %v361
    %580 = vmatpush1.msra.mxu0 %v360
    %581 = vmatprep.subr.mxu0 %v364
    %582 = vmatpush1.msra.mxu0 %v363
    %583 = vmatprep.subr.mxu0 %v367
    %584 = vmatpush1.msra.mxu0 %v366
    %585 = vmatprep.subr.mxu0 %v370
    %586 = vmatpush1.msra.mxu0 %v369
    %587 = vmatprep.subr.mxu0 %v373
    %588 = vmatpush1.msra.mxu0 %v372
    %589 = vmatprep.subr.mxu0 %v376
    %590 = vmatpush1.msra.mxu0 %v375
    %591 = vmatprep.subr.mxu0 %v379
    %592 = vmatpush1.msra.mxu0 %v378
    %593 = vmatprep.subr.mxu0 %v382
    %594 = vmatpush1.msra.mxu0 %v381
    %595 = vmatprep.subr.mxu0 %v385
    %596 = vmatpush1.msra.mxu0 %v384
    %597 = vmatprep.subr.mxu0 0.0
    %598 = vmatpush1.msra.mxu0 0.0
    %599 = vmatprep.subr.mxu0 0.0
    %600 = vmatpush1.msra.mxu0 0.0
    %601 = vmatprep.subr.mxu0 0.0
    %602 = vmatpush1.msra.mxu0 0.0
    %603 = vmatprep.subr.mxu0 0.0
    %604 = vmatpush1.msra.mxu0 0.0
    %605 = vmatprep.subr.mxu0 0.0
    %606 = vmatpush1.msra.mxu0 0.0
    %607 = vmatprep.subr.mxu0 0.0
    %608 = vmatpush1.msra.mxu0 0.0
    %609 = vmatprep.subr.mxu0 0.0
    %610 = vmatpush1.msra.mxu0 0.0
    %611 = vmatprep.subr.mxu0 0.0
    %612 = vmatpush1.msra.mxu0 0.0
    %613 = vmatprep.subr.mxu0 0.0
    %614 = vmatpush1.msra.mxu0 0.0
    %615 = vmatprep.subr.mxu0 0.0
    %616 = vmatpush1.msra.mxu0 0.0
    %617 = vmatprep.subr.mxu0 0.0
    %618 = vmatpush1.msra.mxu0 0.0
    %619 = vmatprep.subr.mxu0 0.0
    %620 = vmatpush1.msra.mxu0 0.0
    %621 = vmatprep.subr.mxu0 0.0
    %622 = vmatpush1.msra.mxu0 0.0
    %623 = vmatprep.subr.mxu0 0.0
    %624 = vmatpush1.msra.mxu0 0.0
    %625 = vmatprep.subr.mxu0 0.0
    %626 = vmatpush1.msra.mxu0 0.0
    %627 = vmatprep.subr.mxu0 0.0
    %628 = vmatpush1.msra.mxu0 0.0
    %629 = vmatprep.mubr.f32.mxu0 0.0
    %630 = vmatmul.mubr.f32.gmra.mrb[0].mxu0 %v564
    %v631 = vpop.f32.mrb[0].mxu0
    %v632 = vadd.f32 %v391, %v631
    %v633 = vpop.f32.mrb[0].mxu0
    %v634 = vadd.f32 %v395, %v633
    %635 = vdwg.mxu0
    %636 = vmatprep.subr.mxu0 0.0
    %637 = vmatpush1.msra.mxu0 %v341
    %638 = vmatprep.subr.mxu0 0.0
    %639 = vmatpush1.msra.mxu0 %v344
    %640 = vmatprep.subr.mxu0 0.0
    %641 = vmatpush1.msra.mxu0 %v347
    %642 = vmatprep.subr.mxu0 0.0
    %643 = vmatpush1.msra.mxu0 %v350
    %644 = vmatprep.subr.mxu0 0.0
    %645 = vmatpush1.msra.mxu0 %v353
    %646 = vmatprep.subr.mxu0 0.0
    %647 = vmatpush1.msra.mxu0 %v356
    %648 = vmatprep.subr.mxu0 0.0
    %649 = vmatpush1.msra.mxu0 %v359
    %650 = vmatprep.subr.mxu0 0.0
    %651 = vmatpush1.msra.mxu0 %v362
    %652 = vmatprep.subr.mxu0 0.0
    %653 = vmatpush1.msra.mxu0 %v365
    %654 = vmatprep.subr.mxu0 0.0
    %655 = vmatpush1.msra.mxu0 %v368
    %656 = vmatprep.subr.mxu0 0.0
    %657 = vmatpush1.msra.mxu0 %v371
    %658 = vmatprep.subr.mxu0 0.0
    %659 = vmatpush1.msra.mxu0 %v374
    %660 = vmatprep.subr.mxu0 0.0
    %661 = vmatpush1.msra.mxu0 %v377
    %662 = vmatprep.subr.mxu0 0.0
    %663 = vmatpush1.msra.mxu0 %v380
    %664 = vmatprep.subr.mxu0 0.0
    %665 = vmatpush1.msra.mxu0 %v383
    %666 = vmatprep.subr.mxu0 0.0
    %667 = vmatpush1.msra.mxu0 %v386
    %668 = vmatprep.subr.mxu0 0.0
    %669 = vmatpush1.msra.mxu0 0.0
    %670 = vmatprep.subr.mxu0 0.0
    %671 = vmatpush1.msra.mxu0 0.0
    %672 = vmatprep.subr.mxu0 0.0
    %673 = vmatpush1.msra.mxu0 0.0
    %674 = vmatprep.subr.mxu0 0.0
    %675 = vmatpush1.msra.mxu0 0.0
    %676 = vmatprep.subr.mxu0 0.0
    %677 = vmatpush1.msra.mxu0 0.0
    %678 = vmatprep.subr.mxu0 0.0
    %679 = vmatpush1.msra.mxu0 0.0
    %680 = vmatprep.subr.mxu0 0.0
    %681 = vmatpush1.msra.mxu0 0.0
    %682 = vmatprep.subr.mxu0 0.0
    %683 = vmatpush1.msra.mxu0 0.0
    %684 = vmatprep.subr.mxu0 0.0
    %685 = vmatpush1.msra.mxu0 0.0
    %686 = vmatprep.subr.mxu0 0.0
    %687 = vmatpush1.msra.mxu0 0.0
    %688 = vmatprep.subr.mxu0 0.0
    %689 = vmatpush1.msra.mxu0 0.0
    %690 = vmatprep.subr.mxu0 0.0
    %691 = vmatpush1.msra.mxu0 0.0
    %692 = vmatprep.subr.mxu0 0.0
    %693 = vmatpush1.msra.mxu0 0.0
    %694 = vmatprep.subr.mxu0 0.0
    %695 = vmatpush1.msra.mxu0 0.0
    %696 = vmatprep.subr.mxu0 0.0
    %697 = vmatpush1.msra.mxu0 0.0
    %698 = vmatprep.subr.mxu0 0.0
    %699 = vmatpush1.msra.mxu0 0.0
    %700 = vmatprep.mubr.f32.mxu0 0.0
    %701 = vmatmul.mubr.f32.gmra.mrb[0].mxu0 %v564
    %v702 = vpop.f32.mrb[0].mxu0
    %v703 = vadd.f32 %v399, %v702
    %v704 = vpop.f32.mrb[0].mxu0
    %705 = vdwg.mxu0
    %v706 = vadd.f32 %v192, %v632
    %v707 = vxor.u32 %v706, 2147483648
    %v708 = vmul.f32 %v707, 1.442695
    %v709 = vpow.pop %v708
    %v710 = vadd.f32 %v709, 1.0
    %v711 = vrcp.pop %v710
    %v712 = vmul.f32 1.0, %v711
    %v713 = vadd.f32 %v194, %v634
    %v714 = vxor.u32 %v713, 2147483648
    %v715 = vmul.f32 %v714, 1.442695
    %v716 = vpow.pop %v715
    %v717 = vadd.f32 %v716, 1.0
    %v718 = vrcp.pop %v717
    %v719 = vmul.f32 1.0, %v718
    %v720 = vmul.f32 %v712, %v703
    %v721 = vadd.f32 %v304, %v720
    %v722 = vtanh.pop %v721
    %v723 = vsub.f32 1.0, %v719
    %v724 = vmul.f32 %v723, %v722
    %v725 = vmul.f32 %v719, %v564
    %v726 = vadd.f32 %v724, %v725
    %727 = vmatprep.subr.mxu0 %v340
    %728 = vmatpush1.msra.mxu0 %v339
    %729 = vmatprep.subr.mxu0 %v343
    %730 = vmatpush1.msra.mxu0 %v342
    %731 = vmatprep.subr.mxu0 %v346
    %732 = vmatpush1.msra.mxu0 %v345
    %733 = vmatprep.subr.mxu0 %v349
    %734 = vmatpush1.msra.mxu0 %v348
    %735 = vmatprep.subr.mxu0 %v352
    %736 = vmatpush1.msra.mxu0 %v351
    %737 = vmatprep.subr.mxu0 %v355
    %738 = vmatpush1.msra.mxu0 %v354
    %739 = vmatprep.subr.mxu0 %v358
    %740 = vmatpush1.msra.mxu0 %v357
    %741 = vmatprep.subr.mxu0 %v361
    %742 = vmatpush1.msra.mxu0 %v360
    %743 = vmatprep.subr.mxu0 %v364
    %744 = vmatpush1.msra.mxu0 %v363
    %745 = vmatprep.subr.mxu0 %v367
    %746 = vmatpush1.msra.mxu0 %v366
    %747 = vmatprep.subr.mxu0 %v370
    %748 = vmatpush1.msra.mxu0 %v369
    %749 = vmatprep.subr.mxu0 %v373
    %750 = vmatpush1.msra.mxu0 %v372
    %751 = vmatprep.subr.mxu0 %v376
    %752 = vmatpush1.msra.mxu0 %v375
    %753 = vmatprep.subr.mxu0 %v379
    %754 = vmatpush1.msra.mxu0 %v378
    %755 = vmatprep.subr.mxu0 %v382
    %756 = vmatpush1.msra.mxu0 %v381
    %757 = vmatprep.subr.mxu0 %v385
    %758 = vmatpush1.msra.mxu0 %v384
    %759 = vmatprep.subr.mxu0 0.0
    %760 = vmatpush1.msra.mxu0 0.0
    %761 = vmatprep.subr.mxu0 0.0
    %762 = vmatpush1.msra.mxu0 0.0
    %763 = vmatprep.subr.mxu0 0.0
    %764 = vmatpush1.msra.mxu0 0.0
    %765 = vmatprep.subr.mxu0 0.0
    %766 = vmatpush1.msra.mxu0 0.0
    %767 = vmatprep.subr.mxu0 0.0
    %768 = vmatpush1.msra.mxu0 0.0
    %769 = vmatprep.subr.mxu0 0.0
    %770 = vmatpush1.msra.mxu0 0.0
    %771 = vmatprep.subr.mxu0 0.0
    %772 = vmatpush1.msra.mxu0 0.0
    %773 = vmatprep.subr.mxu0 0.0
    %774 = vmatpush1.msra.mxu0 0.0
    %775 = vmatprep.subr.mxu0 0.0
    %776 = vmatpush1.msra.mxu0 0.0
    %777 = vmatprep.subr.mxu0 0.0
    %778 = vmatpush1.msra.mxu0 0.0
    %779 = vmatprep.subr.mxu0 0.0
    %780 = vmatpush1.msra.mxu0 0.0
    %781 = vmatprep.subr.mxu0 0.0
    %782 = vmatpush1.msra.mxu0 0.0
    %783 = vmatprep.subr.mxu0 0.0
    %784 = vmatpush1.msra.mxu0 0.0
    %785 = vmatprep.subr.mxu0 0.0
    %786 = vmatpush1.msra.mxu0 0.0
    %787 = vmatprep.subr.mxu0 0.0
    %788 = vmatpush1.msra.mxu0 0.0
    %789 = vmatprep.subr.mxu0 0.0
    %790 = vmatpush1.msra.mxu0 0.0
    %791 = vmatprep.mubr.f32.mxu0 0.0
    %792 = vmatmul.mubr.f32.gmra.mrb[0].mxu0 %v726
    %v793 = vpop.f32.mrb[0].mxu0
    %v794 = vadd.f32 %v391, %v793
    %v795 = vpop.f32.mrb[0].mxu0
    %v796 = vadd.f32 %v395, %v795
    %797 = vdwg.mxu0
    %798 = vmatprep.subr.mxu0 0.0
    %799 = vmatpush1.msra.mxu0 %v341
    %800 = vmatprep.subr.mxu0 0.0
    %801 = vmatpush1.msra.mxu0 %v344
    %802 = vmatprep.subr.mxu0 0.0
    %803 = vmatpush1.msra.mxu0 %v347
    %804 = vmatprep.subr.mxu0 0.0
    %805 = vmatpush1.msra.mxu0 %v350
    %806 = vmatprep.subr.mxu0 0.0
    %807 = vmatpush1.msra.mxu0 %v353
    %808 = vmatprep.subr.mxu0 0.0
    %809 = vmatpush1.msra.mxu0 %v356
    %810 = vmatprep.subr.mxu0 0.0
    %811 = vmatpush1.msra.mxu0 %v359
    %812 = vmatprep.subr.mxu0 0.0
    %813 = vmatpush1.msra.mxu0 %v362
    %814 = vmatprep.subr.mxu0 0.0
    %815 = vmatpush1.msra.mxu0 %v365
    %816 = vmatprep.subr.mxu0 0.0
    %817 = vmatpush1.msra.mxu0 %v368
    %818 = vmatprep.subr.mxu0 0.0
    %819 = vmatpush1.msra.mxu0 %v371
    %820 = vmatprep.subr.mxu0 0.0
    %821 = vmatpush1.msra.mxu0 %v374
    %822 = vmatprep.subr.mxu0 0.0
    %823 = vmatpush1.msra.mxu0 %v377
    %824 = vmatprep.subr.mxu0 0.0
    %825 = vmatpush1.msra.mxu0 %v380
    %826 = vmatprep.subr.mxu0 0.0
    %827 = vmatpush1.msra.mxu0 %v383
    %828 = vmatprep.subr.mxu0 0.0
    %829 = vmatpush1.msra.mxu0 %v386
    %830 = vmatprep.subr.mxu0 0.0
    %831 = vmatpush1.msra.mxu0 0.0
    %832 = vmatprep.subr.mxu0 0.0
    %833 = vmatpush1.msra.mxu0 0.0
    %834 = vmatprep.subr.mxu0 0.0
    %835 = vmatpush1.msra.mxu0 0.0
    %836 = vmatprep.subr.mxu0 0.0
    %837 = vmatpush1.msra.mxu0 0.0
    %838 = vmatprep.subr.mxu0 0.0
    %839 = vmatpush1.msra.mxu0 0.0
    %840 = vmatprep.subr.mxu0 0.0
    %841 = vmatpush1.msra.mxu0 0.0
    %842 = vmatprep.subr.mxu0 0.0
    %843 = vmatpush1.msra.mxu0 0.0
    %844 = vmatprep.subr.mxu0 0.0
    %845 = vmatpush1.msra.mxu0 0.0
    %846 = vmatprep.subr.mxu0 0.0
    %847 = vmatpush1.msra.mxu0 0.0
    %848 = vmatprep.subr.mxu0 0.0
    %849 = vmatpush1.msra.mxu0 0.0
    %850 = vmatprep.subr.mxu0 0.0
    %851 = vmatpush1.msra.mxu0 0.0
    %852 = vmatprep.subr.mxu0 0.0
    %853 = vmatpush1.msra.mxu0 0.0
    %854 = vmatprep.subr.mxu0 0.0
    %855 = vmatpush1.msra.mxu0 0.0
    %856 = vmatprep.subr.mxu0 0.0
    %857 = vmatpush1.msra.mxu0 0.0
    %858 = vmatprep.subr.mxu0 0.0
    %859 = vmatpush1.msra.mxu0 0.0
    %860 = vmatprep.subr.mxu0 0.0
    %861 = vmatpush1.msra.mxu0 0.0
    %862 = vmatprep.mubr.f32.mxu0 0.0
    %863 = vmatmul.mubr.f32.gmra.mrb[0].mxu0 %v726
    %v864 = vpop.f32.mrb[0].mxu0
    %v865 = vadd.f32 %v399, %v864
    %v866 = vpop.f32.mrb[0].mxu0
    %867 = vdwg.mxu0
    %v868 = vadd.f32 %v198, %v794
    %v869 = vxor.u32 %v868, 2147483648
    %v870 = vmul.f32 %v869, 1.442695
    %v871 = vpow.pop %v870
    %v872 = vadd.f32 %v871, 1.0
    %v873 = vrcp.pop %v872
    %v874 = vmul.f32 1.0, %v873
    %v875 = vadd.f32 %v200, %v796
    %v876 = vxor.u32 %v875, 2147483648
    %v877 = vmul.f32 %v876, 1.442695
    %v878 = vpow.pop %v877
    %v879 = vadd.f32 %v878, 1.0
    %v880 = vrcp.pop %v879
    %v881 = vmul.f32 1.0, %v880
    %v882 = vmul.f32 %v874, %v865
    %v883 = vadd.f32 %v309, %v882
    %v884 = vtanh.pop %v883
    %v885 = vsub.f32 1.0, %v881
    %v886 = vmul.f32 %v885, %v884
    %v887 = vmul.f32 %v881, %v726
    %v888 = vadd.f32 %v886, %v887
    %889 = vmatprep.subr.mxu0 %v340
    %890 = vmatpush1.msra.mxu0 %v339
    %891 = vmatprep.subr.mxu0 %v343
    %892 = vmatpush1.msra.mxu0 %v342
    %893 = vmatprep.subr.mxu0 %v346
    %894 = vmatpush1.msra.mxu0 %v345
    %895 = vmatprep.subr.mxu0 %v349
    %896 = vmatpush1.msra.mxu0 %v348
    %897 = vmatprep.subr.mxu0 %v352
    %898 = vmatpush1.msra.mxu0 %v351
    %899 = vmatprep.subr.mxu0 %v355
    %900 = vmatpush1.msra.mxu0 %v354
    %901 = vmatprep.subr.mxu0 %v358
    %902 = vmatpush1.msra.mxu0 %v357
    %903 = vmatprep.subr.mxu0 %v361
    %904 = vmatpush1.msra.mxu0 %v360
    %905 = vmatprep.subr.mxu0 %v364
    %906 = vmatpush1.msra.mxu0 %v363
    %907 = vmatprep.subr.mxu0 %v367
    %908 = vmatpush1.msra.mxu0 %v366
    %909 = vmatprep.subr.mxu0 %v370
    %910 = vmatpush1.msra.mxu0 %v369
    %911 = vmatprep.subr.mxu0 %v373
    %912 = vmatpush1.msra.mxu0 %v372
    %913 = vmatprep.subr.mxu0 %v376
    %914 = vmatpush1.msra.mxu0 %v375
    %915 = vmatprep.subr.mxu0 %v379
    %916 = vmatpush1.msra.mxu0 %v378
    %917 = vmatprep.subr.mxu0 %v382
    %918 = vmatpush1.msra.mxu0 %v381
    %919 = vmatprep.subr.mxu0 %v385
    %920 = vmatpush1.msra.mxu0 %v384
    %921 = vmatprep.subr.mxu0 0.0
    %922 = vmatpush1.msra.mxu0 0.0
    %923 = vmatprep.subr.mxu0 0.0
    %924 = vmatpush1.msra.mxu0 0.0
    %925 = vmatprep.subr.mxu0 0.0
    %926 = vmatpush1.msra.mxu0 0.0
    %927 = vmatprep.subr.mxu0 0.0
    %928 = vmatpush1.msra.mxu0 0.0
    %929 = vmatprep.subr.mxu0 0.0
    %930 = vmatpush1.msra.mxu0 0.0
    %931 = vmatprep.subr.mxu0 0.0
    %932 = vmatpush1.msra.mxu0 0.0
    %933 = vmatprep.subr.mxu0 0.0
    %934 = vmatpush1.msra.mxu0 0.0
    %935 = vmatprep.subr.mxu0 0.0
    %936 = vmatpush1.msra.mxu0 0.0
    %937 = vmatprep.subr.mxu0 0.0
    %938 = vmatpush1.msra.mxu0 0.0
    %939 = vmatprep.subr.mxu0 0.0
    %940 = vmatpush1.msra.mxu0 0.0
    %941 = vmatprep.subr.mxu0 0.0
    %942 = vmatpush1.msra.mxu0 0.0
    %943 = vmatprep.subr.mxu0 0.0
    %944 = vmatpush1.msra.mxu0 0.0
    %945 = vmatprep.subr.mxu0 0.0
    %946 = vmatpush1.msra.mxu0 0.0
    %947 = vmatprep.subr.mxu0 0.0
    %948 = vmatpush1.msra.mxu0 0.0
    %949 = vmatprep.subr.mxu0 0.0
    %950 = vmatpush1.msra.mxu0 0.0
    %951 = vmatprep.subr.mxu0 0.0
    %952 = vmatpush1.msra.mxu0 0.0
    %953 = vmatprep.mubr.f32.mxu0 0.0
    %954 = vmatmul.mubr.f32.gmra.mrb[0].mxu0 %v888
    %v955 = vpop.f32.mrb[0].mxu0
    %v956 = vadd.f32 %v391, %v955
    %v957 = vpop.f32.mrb[0].mxu0
    %v958 = vadd.f32 %v395, %v957
    %959 = vdwg.mxu0
    %960 = vmatprep.subr.mxu0 0.0
    %961 = vmatpush1.msra.mxu0 %v341
    %962 = vmatprep.subr.mxu0 0.0
    %963 = vmatpush1.msra.mxu0 %v344
    %964 = vmatprep.subr.mxu0 0.0
    %965 = vmatpush1.msra.mxu0 %v347
    %966 = vmatprep.subr.mxu0 0.0
    %967 = vmatpush1.msra.mxu0 %v350
    %968 = vmatprep.subr.mxu0 0.0
    %969 = vmatpush1.msra.mxu0 %v353
    %970 = vmatprep.subr.mxu0 0.0
    %971 = vmatpush1.msra.mxu0 %v356
    %972 = vmatprep.subr.mxu0 0.0
    %973 = vmatpush1.msra.mxu0 %v359
    %974 = vmatprep.subr.mxu0 0.0
    %975 = vmatpush1.msra.mxu0 %v362
    %976 = vmatprep.subr.mxu0 0.0
    %977 = vmatpush1.msra.mxu0 %v365
    %978 = vmatprep.subr.mxu0 0.0
    %979 = vmatpush1.msra.mxu0 %v368
    %980 = vmatprep.subr.mxu0 0.0
    %981 = vmatpush1.msra.mxu0 %v371
    %982 = vmatprep.subr.mxu0 0.0
    %983 = vmatpush1.msra.mxu0 %v374
    %984 = vmatprep.subr.mxu0 0.0
    %985 = vmatpush1.msra.mxu0 %v377
    %986 = vmatprep.subr.mxu0 0.0
    %987 = vmatpush1.msra.mxu0 %v380
    %988 = vmatprep.subr.mxu0 0.0
    %989 = vmatpush1.msra.mxu0 %v383
    %990 = vmatprep.subr.mxu0 0.0
    %991 = vmatpush1.msra.mxu0 %v386
    %992 = vmatprep.subr.mxu0 0.0
    %993 = vmatpush1.msra.mxu0 0.0
    %994 = vmatprep.subr.mxu0 0.0
    %995 = vmatpush1.msra.mxu0 0.0
    %996 = vmatprep.subr.mxu0 0.0
    %997 = vmatpush1.msra.mxu0 0.0
    %998 = vmatprep.subr.mxu0 0.0
    %999 = vmatpush1.msra.mxu0 0.0
    %1000 = vmatprep.subr.mxu0 0.0
    %1001 = vmatpush1.msra.mxu0 0.0
    %1002 = vmatprep.subr.mxu0 0.0
    %1003 = vmatpush1.msra.mxu0 0.0
    %1004 = vmatprep.subr.mxu0 0.0
    %1005 = vmatpush1.msra.mxu0 0.0
    %1006 = vmatprep.subr.mxu0 0.0
    %1007 = vmatpush1.msra.mxu0 0.0
    %1008 = vmatprep.subr.mxu0 0.0
    %1009 = vmatpush1.msra.mxu0 0.0
    %1010 = vmatprep.subr.mxu0 0.0
    %1011 = vmatpush1.msra.mxu0 0.0
    %1012 = vmatprep.subr.mxu0 0.0
    %1013 = vmatpush1.msra.mxu0 0.0
    %1014 = vmatprep.subr.mxu0 0.0
    %1015 = vmatpush1.msra.mxu0 0.0
    %1016 = vmatprep.subr.mxu0 0.0
    %1017 = vmatpush1.msra.mxu0 0.0
    %1018 = vmatprep.subr.mxu0 0.0
    %1019 = vmatpush1.msra.mxu0 0.0
    %1020 = vmatprep.subr.mxu0 0.0
    %1021 = vmatpush1.msra.mxu0 0.0
    %1022 = vmatprep.subr.mxu0 0.0
    %1023 = vmatpush1.msra.mxu0 0.0
    %1024 = vmatprep.mubr.f32.mxu0 0.0
    %1025 = vmatmul.mubr.f32.gmra.mrb[0].mxu0 %v888
    %v1026 = vpop.f32.mrb[0].mxu0
    %v1027 = vadd.f32 %v399, %v1026
    %v1028 = vpop.f32.mrb[0].mxu0
    %1029 = vdwg.mxu0
    %v1030 = vadd.f32 %v204, %v956
    %v1031 = vxor.u32 %v1030, 2147483648
    %v1032 = vmul.f32 %v1031, 1.442695
    %v1033 = vpow.pop %v1032
    %v1034 = vadd.f32 %v1033, 1.0
    %v1035 = vrcp.pop %v1034
    %v1036 = vmul.f32 1.0, %v1035
    %v1037 = vadd.f32 %v206, %v958
    %v1038 = vxor.u32 %v1037, 2147483648
    %v1039 = vmul.f32 %v1038, 1.442695
    %v1040 = vpow.pop %v1039
    %v1041 = vadd.f32 %v1040, 1.0
    %v1042 = vrcp.pop %v1041
    %v1043 = vmul.f32 1.0, %v1042
    %v1044 = vmul.f32 %v1036, %v1027
    %v1045 = vadd.f32 %v314, %v1044
    %v1046 = vtanh.pop %v1045
    %v1047 = vsub.f32 1.0, %v1043
    %v1048 = vmul.f32 %v1047, %v1046
    %v1049 = vmul.f32 %v1043, %v888
    %v1050 = vadd.f32 %v1048, %v1049
    %1051 = vmatprep.subr.mxu0 %v340
    %1052 = vmatpush1.msra.mxu0 %v339
    %1053 = vmatprep.subr.mxu0 %v343
    %1054 = vmatpush1.msra.mxu0 %v342
    %1055 = vmatprep.subr.mxu0 %v346
    %1056 = vmatpush1.msra.mxu0 %v345
    %1057 = vmatprep.subr.mxu0 %v349
    %1058 = vmatpush1.msra.mxu0 %v348
    %1059 = vmatprep.subr.mxu0 %v352
    %1060 = vmatpush1.msra.mxu0 %v351
    %1061 = vmatprep.subr.mxu0 %v355
    %1062 = vmatpush1.msra.mxu0 %v354
    %1063 = vmatprep.subr.mxu0 %v358
    %1064 = vmatpush1.msra.mxu0 %v357
    %1065 = vmatprep.subr.mxu0 %v361
    %1066 = vmatpush1.msra.mxu0 %v360
    %1067 = vmatprep.subr.mxu0 %v364
    %1068 = vmatpush1.msra.mxu0 %v363
    %1069 = vmatprep.subr.mxu0 %v367
    %1070 = vmatpush1.msra.mxu0 %v366
    %1071 = vmatprep.subr.mxu0 %v370
    %1072 = vmatpush1.msra.mxu0 %v369
    %1073 = vmatprep.subr.mxu0 %v373
    %1074 = vmatpush1.msra.mxu0 %v372
    %1075 = vmatprep.subr.mxu0 %v376
    %1076 = vmatpush1.msra.mxu0 %v375
    %1077 = vmatprep.subr.mxu0 %v379
    %1078 = vmatpush1.msra.mxu0 %v378
    %1079 = vmatprep.subr.mxu0 %v382
    %1080 = vmatpush1.msra.mxu0 %v381
    %1081 = vmatprep.subr.mxu0 %v385
    %1082 = vmatpush1.msra.mxu0 %v384
    %1083 = vmatprep.subr.mxu0 0.0
    %1084 = vmatpush1.msra.mxu0 0.0
    %1085 = vmatprep.subr.mxu0 0.0
    %1086 = vmatpush1.msra.mxu0 0.0
    %1087 = vmatprep.subr.mxu0 0.0
    %1088 = vmatpush1.msra.mxu0 0.0
    %1089 = vmatprep.subr.mxu0 0.0
    %1090 = vmatpush1.msra.mxu0 0.0
    %1091 = vmatprep.subr.mxu0 0.0
    %1092 = vmatpush1.msra.mxu0 0.0
    %1093 = vmatprep.subr.mxu0 0.0
    %1094 = vmatpush1.msra.mxu0 0.0
    %1095 = vmatprep.subr.mxu0 0.0
    %1096 = vmatpush1.msra.mxu0 0.0
    %1097 = vmatprep.subr.mxu0 0.0
    %1098 = vmatpush1.msra.mxu0 0.0
    %1099 = vmatprep.subr.mxu0 0.0
    %1100 = vmatpush1.msra.mxu0 0.0
    %1101 = vmatprep.subr.mxu0 0.0
    %1102 = vmatpush1.msra.mxu0 0.0
    %1103 = vmatprep.subr.mxu0 0.0
    %1104 = vmatpush1.msra.mxu0 0.0
    %1105 = vmatprep.subr.mxu0 0.0
    %1106 = vmatpush1.msra.mxu0 0.0
    %1107 = vmatprep.subr.mxu0 0.0
    %1108 = vmatpush1.msra.mxu0 0.0
    %1109 = vmatprep.subr.mxu0 0.0
    %1110 = vmatpush1.msra.mxu0 0.0
    %1111 = vmatprep.subr.mxu0 0.0
    %1112 = vmatpush1.msra.mxu0 0.0
    %1113 = vmatprep.subr.mxu0 0.0
    %1114 = vmatpush1.msra.mxu0 0.0
    %1115 = vmatprep.mubr.f32.mxu0 0.0
    %1116 = vmatmul.mubr.f32.gmra.mrb[0].mxu0 %v1050
    %v1117 = vpop.f32.mrb[0].mxu0
    %v1118 = vadd.f32 %v391, %v1117
    %v1119 = vpop.f32.mrb[0].mxu0
    %v1120 = vadd.f32 %v395, %v1119
    %1121 = vdwg.mxu0
    %1122 = vmatprep.subr.mxu0 0.0
    %1123 = vmatpush1.msra.mxu0 %v341
    %1124 = vmatprep.subr.mxu0 0.0
    %1125 = vmatpush1.msra.mxu0 %v344
    %1126 = vmatprep.subr.mxu0 0.0
    %1127 = vmatpush1.msra.mxu0 %v347
    %1128 = vmatprep.subr.mxu0 0.0
    %1129 = vmatpush1.msra.mxu0 %v350
    %1130 = vmatprep.subr.mxu0 0.0
    %1131 = vmatpush1.msra.mxu0 %v353
    %1132 = vmatprep.subr.mxu0 0.0
    %1133 = vmatpush1.msra.mxu0 %v356
    %1134 = vmatprep.subr.mxu0 0.0
    %1135 = vmatpush1.msra.mxu0 %v359
    %1136 = vmatprep.subr.mxu0 0.0
    %1137 = vmatpush1.msra.mxu0 %v362
    %1138 = vmatprep.subr.mxu0 0.0
    %1139 = vmatpush1.msra.mxu0 %v365
    %1140 = vmatprep.subr.mxu0 0.0
    %1141 = vmatpush1.msra.mxu0 %v368
    %1142 = vmatprep.subr.mxu0 0.0
    %1143 = vmatpush1.msra.mxu0 %v371
    %1144 = vmatprep.subr.mxu0 0.0
    %1145 = vmatpush1.msra.mxu0 %v374
    %1146 = vmatprep.subr.mxu0 0.0
    %1147 = vmatpush1.msra.mxu0 %v377
    %1148 = vmatprep.subr.mxu0 0.0
    %1149 = vmatpush1.msra.mxu0 %v380
    %1150 = vmatprep.subr.mxu0 0.0
    %1151 = vmatpush1.msra.mxu0 %v383
    %1152 = vmatprep.subr.mxu0 0.0
    %1153 = vmatpush1.msra.mxu0 %v386
    %1154 = vmatprep.subr.mxu0 0.0
    %1155 = vmatpush1.msra.mxu0 0.0
    %1156 = vmatprep.subr.mxu0 0.0
    %1157 = vmatpush1.msra.mxu0 0.0
    %1158 = vmatprep.subr.mxu0 0.0
    %1159 = vmatpush1.msra.mxu0 0.0
    %1160 = vmatprep.subr.mxu0 0.0
    %1161 = vmatpush1.msra.mxu0 0.0
    %1162 = vmatprep.subr.mxu0 0.0
    %1163 = vmatpush1.msra.mxu0 0.0
    %1164 = vmatprep.subr.mxu0 0.0
    %1165 = vmatpush1.msra.mxu0 0.0
    %1166 = vmatprep.subr.mxu0 0.0
    %1167 = vmatpush1.msra.mxu0 0.0
    %1168 = vmatprep.subr.mxu0 0.0
    %1169 = vmatpush1.msra.mxu0 0.0
    %1170 = vmatprep.subr.mxu0 0.0
    %1171 = vmatpush1.msra.mxu0 0.0
    %1172 = vmatprep.subr.mxu0 0.0
    %1173 = vmatpush1.msra.mxu0 0.0
    %1174 = vmatprep.subr.mxu0 0.0
    %1175 = vmatpush1.msra.mxu0 0.0
    %1176 = vmatprep.subr.mxu0 0.0
    %1177 = vmatpush1.msra.mxu0 0.0
    %1178 = vmatprep.subr.mxu0 0.0
    %1179 = vmatpush1.msra.mxu0 0.0
    %1180 = vmatprep.subr.mxu0 0.0
    %1181 = vmatpush1.msra.mxu0 0.0
    %1182 = vmatprep.subr.mxu0 0.0
    %1183 = vmatpush1.msra.mxu0 0.0
    %1184 = vmatprep.subr.mxu0 0.0
    %1185 = vmatpush1.msra.mxu0 0.0
    %1186 = vmatprep.mubr.f32.mxu0 0.0
    %1187 = vmatmul.mubr.f32.gmra.mrb[0].mxu0 %v1050
    %v1188 = vpop.f32.mrb[0].mxu0
    %v1189 = vadd.f32 %v399, %v1188
    %v1190 = vpop.f32.mrb[0].mxu0
    %1191 = vdwg.mxu0
    %v1192 = vadd.f32 %v210, %v1118
    %v1193 = vxor.u32 %v1192, 2147483648
    %v1194 = vmul.f32 %v1193, 1.442695
    %v1195 = vpow.pop %v1194
    %v1196 = vadd.f32 %v1195, 1.0
    %v1197 = vrcp.pop %v1196
    %v1198 = vmul.f32 1.0, %v1197
    %v1199 = vadd.f32 %v212, %v1120
    %v1200 = vxor.u32 %v1199, 2147483648
    %v1201 = vmul.f32 %v1200, 1.442695
    %v1202 = vpow.pop %v1201
    %v1203 = vadd.f32 %v1202, 1.0
    %v1204 = vrcp.pop %v1203
    %v1205 = vmul.f32 1.0, %v1204
    %v1206 = vmul.f32 %v1198, %v1189
    %v1207 = vadd.f32 %v319, %v1206
    %v1208 = vtanh.pop %v1207
    %v1209 = vsub.f32 1.0, %v1205
    %v1210 = vmul.f32 %v1209, %v1208
    %v1211 = vmul.f32 %v1205, %v1050
    %v1212 = vadd.f32 %v1210, %v1211
    %1213 = vmatprep.subr.mxu0 %v340
    %1214 = vmatpush1.msra.mxu0 %v339
    %1215 = vmatprep.subr.mxu0 %v343
    %1216 = vmatpush1.msra.mxu0 %v342
    %1217 = vmatprep.subr.mxu0 %v346
    %1218 = vmatpush1.msra.mxu0 %v345
    %1219 = vmatprep.subr.mxu0 %v349
    %1220 = vmatpush1.msra.mxu0 %v348
    %1221 = vmatprep.subr.mxu0 %v352
    %1222 = vmatpush1.msra.mxu0 %v351
    %1223 = vmatprep.subr.mxu0 %v355
    %1224 = vmatpush1.msra.mxu0 %v354
    %1225 = vmatprep.subr.mxu0 %v358
    %1226 = vmatpush1.msra.mxu0 %v357
    %1227 = vmatprep.subr.mxu0 %v361
    %1228 = vmatpush1.msra.mxu0 %v360
    %1229 = vmatprep.subr.mxu0 %v364
    %1230 = vmatpush1.msra.mxu0 %v363
    %1231 = vmatprep.subr.mxu0 %v367
    %1232 = vmatpush1.msra.mxu0 %v366
    %1233 = vmatprep.subr.mxu0 %v370
    %1234 = vmatpush1.msra.mxu0 %v369
    %1235 = vmatprep.subr.mxu0 %v373
    %1236 = vmatpush1.msra.mxu0 %v372
    %1237 = vmatprep.subr.mxu0 %v376
    %1238 = vmatpush1.msra.mxu0 %v375
    %1239 = vmatprep.subr.mxu0 %v379
    %1240 = vmatpush1.msra.mxu0 %v378
    %1241 = vmatprep.subr.mxu0 %v382
    %1242 = vmatpush1.msra.mxu0 %v381
    %1243 = vmatprep.subr.mxu0 %v385
    %1244 = vmatpush1.msra.mxu0 %v384
    %1245 = vmatprep.subr.mxu0 0.0
    %1246 = vmatpush1.msra.mxu0 0.0
    %1247 = vmatprep.subr.mxu0 0.0
    %1248 = vmatpush1.msra.mxu0 0.0
    %1249 = vmatprep.subr.mxu0 0.0
    %1250 = vmatpush1.msra.mxu0 0.0
    %1251 = vmatprep.subr.mxu0 0.0
    %1252 = vmatpush1.msra.mxu0 0.0
    %1253 = vmatprep.subr.mxu0 0.0
    %1254 = vmatpush1.msra.mxu0 0.0
    %1255 = vmatprep.subr.mxu0 0.0
    %1256 = vmatpush1.msra.mxu0 0.0
    %1257 = vmatprep.subr.mxu0 0.0
    %1258 = vmatpush1.msra.mxu0 0.0
    %1259 = vmatprep.subr.mxu0 0.0
    %1260 = vmatpush1.msra.mxu0 0.0
    %1261 = vmatprep.subr.mxu0 0.0
    %1262 = vmatpush1.msra.mxu0 0.0
    %1263 = vmatprep.subr.mxu0 0.0
    %1264 = vmatpush1.msra.mxu0 0.0
    %1265 = vmatprep.subr.mxu0 0.0
    %1266 = vmatpush1.msra.mxu0 0.0
    %1267 = vmatprep.subr.mxu0 0.0
    %1268 = vmatpush1.msra.mxu0 0.0
    %1269 = vmatprep.subr.mxu0 0.0
    %1270 = vmatpush1.msra.mxu0 0.0
    %1271 = vmatprep.subr.mxu0 0.0
    %1272 = vmatpush1.msra.mxu0 0.0
    %1273 = vmatprep.subr.mxu0 0.0
    %1274 = vmatpush1.msra.mxu0 0.0
    %1275 = vmatprep.subr.mxu0 0.0
    %1276 = vmatpush1.msra.mxu0 0.0
    %1277 = vmatprep.mubr.f32.mxu0 0.0
    %1278 = vmatmul.mubr.f32.gmra.mrb[0].mxu0 %v1212
    %v1279 = vpop.f32.mrb[0].mxu0
    %v1280 = vadd.f32 %v391, %v1279
    %v1281 = vpop.f32.mrb[0].mxu0
    %v1282 = vadd.f32 %v395, %v1281
    %1283 = vdwg.mxu0
    %1284 = vmatprep.subr.mxu0 0.0
    %1285 = vmatpush1.msra.mxu0 %v341
    %1286 = vmatprep.subr.mxu0 0.0
    %1287 = vmatpush1.msra.mxu0 %v344
    %1288 = vmatprep.subr.mxu0 0.0
    %1289 = vmatpush1.msra.mxu0 %v347
    %1290 = vmatprep.subr.mxu0 0.0
    %1291 = vmatpush1.msra.mxu0 %v350
    %1292 = vmatprep.subr.mxu0 0.0
    %1293 = vmatpush1.msra.mxu0 %v353
    %1294 = vmatprep.subr.mxu0 0.0
    %1295 = vmatpush1.msra.mxu0 %v356
    %1296 = vmatprep.subr.mxu0 0.0
    %1297 = vmatpush1.msra.mxu0 %v359
    %1298 = vmatprep.subr.mxu0 0.0
    %1299 = vmatpush1.msra.mxu0 %v362
    %1300 = vmatprep.subr.mxu0 0.0
    %1301 = vmatpush1.msra.mxu0 %v365
    %1302 = vmatprep.subr.mxu0 0.0
    %1303 = vmatpush1.msra.mxu0 %v368
    %1304 = vmatprep.subr.mxu0 0.0
    %1305 = vmatpush1.msra.mxu0 %v371
    %1306 = vmatprep.subr.mxu0 0.0
    %1307 = vmatpush1.msra.mxu0 %v374
    %1308 = vmatprep.subr.mxu0 0.0
    %1309 = vmatpush1.msra.mxu0 %v377
    %1310 = vmatprep.subr.mxu0 0.0
    %1311 = vmatpush1.msra.mxu0 %v380
    %1312 = vmatprep.subr.mxu0 0.0
    %1313 = vmatpush1.msra.mxu0 %v383
    %1314 = vmatprep.subr.mxu0 0.0
    %1315 = vmatpush1.msra.mxu0 %v386
    %1316 = vmatprep.subr.mxu0 0.0
    %1317 = vmatpush1.msra.mxu0 0.0
    %1318 = vmatprep.subr.mxu0 0.0
    %1319 = vmatpush1.msra.mxu0 0.0
    %1320 = vmatprep.subr.mxu0 0.0
    %1321 = vmatpush1.msra.mxu0 0.0
    %1322 = vmatprep.subr.mxu0 0.0
    %1323 = vmatpush1.msra.mxu0 0.0
    %1324 = vmatprep.subr.mxu0 0.0
    %1325 = vmatpush1.msra.mxu0 0.0
    %1326 = vmatprep.subr.mxu0 0.0
    %1327 = vmatpush1.msra.mxu0 0.0
    %1328 = vmatprep.subr.mxu0 0.0
    %1329 = vmatpush1.msra.mxu0 0.0
    %1330 = vmatprep.subr.mxu0 0.0
    %1331 = vmatpush1.msra.mxu0 0.0
    %1332 = vmatprep.subr.mxu0 0.0
    %1333 = vmatpush1.msra.mxu0 0.0
    %1334 = vmatprep.subr.mxu0 0.0
    %1335 = vmatpush1.msra.mxu0 0.0
    %1336 = vmatprep.subr.mxu0 0.0
    %1337 = vmatpush1.msra.mxu0 0.0
    %1338 = vmatprep.subr.mxu0 0.0
    %1339 = vmatpush1.msra.mxu0 0.0
    %1340 = vmatprep.subr.mxu0 0.0
    %1341 = vmatpush1.msra.mxu0 0.0
    %1342 = vmatprep.subr.mxu0 0.0
    %1343 = vmatpush1.msra.mxu0 0.0
    %1344 = vmatprep.subr.mxu0 0.0
    %1345 = vmatpush1.msra.mxu0 0.0
    %1346 = vmatprep.subr.mxu0 0.0
    %1347 = vmatpush1.msra.mxu0 0.0
    %1348 = vmatprep.mubr.f32.mxu0 0.0
    %1349 = vmatmul.mubr.f32.gmra.mrb[0].mxu0 %v1212
    %v1350 = vpop.f32.mrb[0].mxu0
    %v1351 = vadd.f32 %v399, %v1350
    %v1352 = vpop.f32.mrb[0].mxu0
    %1353 = vdwg.mxu0
    %v1354 = vadd.f32 %v216, %v1280
    %v1355 = vxor.u32 %v1354, 2147483648
    %v1356 = vmul.f32 %v1355, 1.442695
    %v1357 = vpow.pop %v1356
    %v1358 = vadd.f32 %v1357, 1.0
    %v1359 = vrcp.pop %v1358
    %v1360 = vmul.f32 1.0, %v1359
    %v1361 = vadd.f32 %v218, %v1282
    %v1362 = vxor.u32 %v1361, 2147483648
    %v1363 = vmul.f32 %v1362, 1.442695
    %v1364 = vpow.pop %v1363
    %v1365 = vadd.f32 %v1364, 1.0
    %v1366 = vrcp.pop %v1365
    %v1367 = vmul.f32 1.0, %v1366
    %v1368 = vmul.f32 %v1360, %v1351
    %v1369 = vadd.f32 %v324, %v1368
    %v1370 = vtanh.pop %v1369
    %v1371 = vsub.f32 1.0, %v1367
    %v1372 = vmul.f32 %v1371, %v1370
    %v1373 = vmul.f32 %v1367, %v1212
    %v1374 = vadd.f32 %v1372, %v1373
    %1375 = vmatprep.subr.mxu0 %v340
    %1376 = vmatpush1.msra.mxu0 %v339
    %1377 = vmatprep.subr.mxu0 %v343
    %1378 = vmatpush1.msra.mxu0 %v342
    %1379 = vmatprep.subr.mxu0 %v346
    %1380 = vmatpush1.msra.mxu0 %v345
    %1381 = vmatprep.subr.mxu0 %v349
    %1382 = vmatpush1.msra.mxu0 %v348
    %1383 = vmatprep.subr.mxu0 %v352
    %1384 = vmatpush1.msra.mxu0 %v351
    %1385 = vmatprep.subr.mxu0 %v355
    %1386 = vmatpush1.msra.mxu0 %v354
    %1387 = vmatprep.subr.mxu0 %v358
    %1388 = vmatpush1.msra.mxu0 %v357
    %1389 = vmatprep.subr.mxu0 %v361
    %1390 = vmatpush1.msra.mxu0 %v360
    %1391 = vmatprep.subr.mxu0 %v364
    %1392 = vmatpush1.msra.mxu0 %v363
    %1393 = vmatprep.subr.mxu0 %v367
    %1394 = vmatpush1.msra.mxu0 %v366
    %1395 = vmatprep.subr.mxu0 %v370
    %1396 = vmatpush1.msra.mxu0 %v369
    %1397 = vmatprep.subr.mxu0 %v373
    %1398 = vmatpush1.msra.mxu0 %v372
    %1399 = vmatprep.subr.mxu0 %v376
    %1400 = vmatpush1.msra.mxu0 %v375
    %1401 = vmatprep.subr.mxu0 %v379
    %1402 = vmatpush1.msra.mxu0 %v378
    %1403 = vmatprep.subr.mxu0 %v382
    %1404 = vmatpush1.msra.mxu0 %v381
    %1405 = vmatprep.subr.mxu0 %v385
    %1406 = vmatpush1.msra.mxu0 %v384
    %1407 = vmatprep.subr.mxu0 0.0
    %1408 = vmatpush1.msra.mxu0 0.0
    %1409 = vmatprep.subr.mxu0 0.0
    %1410 = vmatpush1.msra.mxu0 0.0
    %1411 = vmatprep.subr.mxu0 0.0
    %1412 = vmatpush1.msra.mxu0 0.0
    %1413 = vmatprep.subr.mxu0 0.0
    %1414 = vmatpush1.msra.mxu0 0.0
    %1415 = vmatprep.subr.mxu0 0.0
    %1416 = vmatpush1.msra.mxu0 0.0
    %1417 = vmatprep.subr.mxu0 0.0
    %1418 = vmatpush1.msra.mxu0 0.0
    %1419 = vmatprep.subr.mxu0 0.0
    %1420 = vmatpush1.msra.mxu0 0.0
    %1421 = vmatprep.subr.mxu0 0.0
    %1422 = vmatpush1.msra.mxu0 0.0
    %1423 = vmatprep.subr.mxu0 0.0
    %1424 = vmatpush1.msra.mxu0 0.0
    %1425 = vmatprep.subr.mxu0 0.0
    %1426 = vmatpush1.msra.mxu0 0.0
    %1427 = vmatprep.subr.mxu0 0.0
    %1428 = vmatpush1.msra.mxu0 0.0
    %1429 = vmatprep.subr.mxu0 0.0
    %1430 = vmatpush1.msra.mxu0 0.0
    %1431 = vmatprep.subr.mxu0 0.0
    %1432 = vmatpush1.msra.mxu0 0.0
    %1433 = vmatprep.subr.mxu0 0.0
    %1434 = vmatpush1.msra.mxu0 0.0
    %1435 = vmatprep.subr.mxu0 0.0
    %1436 = vmatpush1.msra.mxu0 0.0
    %1437 = vmatprep.subr.mxu0 0.0
    %1438 = vmatpush1.msra.mxu0 0.0
    %1439 = vmatprep.mubr.f32.mxu0 0.0
    %1440 = vmatmul.mubr.f32.gmra.mrb[0].mxu0 %v1374
    %v1441 = vpop.f32.mrb[0].mxu0
    %v1442 = vadd.f32 %v391, %v1441
    %v1443 = vpop.f32.mrb[0].mxu0
    %v1444 = vadd.f32 %v395, %v1443
    %1445 = vdwg.mxu0
    %1446 = vmatprep.subr.mxu0 0.0
    %1447 = vmatpush1.msra.mxu0 %v341
    %1448 = vmatprep.subr.mxu0 0.0
    %1449 = vmatpush1.msra.mxu0 %v344
    %1450 = vmatprep.subr.mxu0 0.0
    %1451 = vmatpush1.msra.mxu0 %v347
    %1452 = vmatprep.subr.mxu0 0.0
    %1453 = vmatpush1.msra.mxu0 %v350
    %1454 = vmatprep.subr.mxu0 0.0
    %1455 = vmatpush1.msra.mxu0 %v353
    %1456 = vmatprep.subr.mxu0 0.0
    %1457 = vmatpush1.msra.mxu0 %v356
    %1458 = vmatprep.subr.mxu0 0.0
    %1459 = vmatpush1.msra.mxu0 %v359
    %1460 = vmatprep.subr.mxu0 0.0
    %1461 = vmatpush1.msra.mxu0 %v362
    %1462 = vmatprep.subr.mxu0 0.0
    %1463 = vmatpush1.msra.mxu0 %v365
    %1464 = vmatprep.subr.mxu0 0.0
    %1465 = vmatpush1.msra.mxu0 %v368
    %1466 = vmatprep.subr.mxu0 0.0
    %1467 = vmatpush1.msra.mxu0 %v371
    %1468 = vmatprep.subr.mxu0 0.0
    %1469 = vmatpush1.msra.mxu0 %v374
    %1470 = vmatprep.subr.mxu0 0.0
    %1471 = vmatpush1.msra.mxu0 %v377
    %1472 = vmatprep.subr.mxu0 0.0
    %1473 = vmatpush1.msra.mxu0 %v380
    %1474 = vmatprep.subr.mxu0 0.0
    %1475 = vmatpush1.msra.mxu0 %v383
    %1476 = vmatprep.subr.mxu0 0.0
    %1477 = vmatpush1.msra.mxu0 %v386
    %1478 = vmatprep.subr.mxu0 0.0
    %1479 = vmatpush1.msra.mxu0 0.0
    %1480 = vmatprep.subr.mxu0 0.0
    %1481 = vmatpush1.msra.mxu0 0.0
    %1482 = vmatprep.subr.mxu0 0.0
    %1483 = vmatpush1.msra.mxu0 0.0
    %1484 = vmatprep.subr.mxu0 0.0
    %1485 = vmatpush1.msra.mxu0 0.0
    %1486 = vmatprep.subr.mxu0 0.0
    %1487 = vmatpush1.msra.mxu0 0.0
    %1488 = vmatprep.subr.mxu0 0.0
    %1489 = vmatpush1.msra.mxu0 0.0
    %1490 = vmatprep.subr.mxu0 0.0
    %1491 = vmatpush1.msra.mxu0 0.0
    %1492 = vmatprep.subr.mxu0 0.0
    %1493 = vmatpush1.msra.mxu0 0.0
    %1494 = vmatprep.subr.mxu0 0.0
    %1495 = vmatpush1.msra.mxu0 0.0
    %1496 = vmatprep.subr.mxu0 0.0
    %1497 = vmatpush1.msra.mxu0 0.0
    %1498 = vmatprep.subr.mxu0 0.0
    %1499 = vmatpush1.msra.mxu0 0.0
    %1500 = vmatprep.subr.mxu0 0.0
    %1501 = vmatpush1.msra.mxu0 0.0
    %1502 = vmatprep.subr.mxu0 0.0
    %1503 = vmatpush1.msra.mxu0 0.0
    %1504 = vmatprep.subr.mxu0 0.0
    %1505 = vmatpush1.msra.mxu0 0.0
    %1506 = vmatprep.subr.mxu0 0.0
    %1507 = vmatpush1.msra.mxu0 0.0
    %1508 = vmatprep.subr.mxu0 0.0
    %1509 = vmatpush1.msra.mxu0 0.0
    %1510 = vmatprep.mubr.f32.mxu0 0.0
    %1511 = vmatmul.mubr.f32.gmra.mrb[0].mxu0 %v1374
    %v1512 = vpop.f32.mrb[0].mxu0
    %v1513 = vadd.f32 %v399, %v1512
    %v1514 = vpop.f32.mrb[0].mxu0
    %1515 = vdwg.mxu0
    %v1516 = vadd.f32 %v222, %v1442
    %v1517 = vxor.u32 %v1516, 2147483648
    %v1518 = vmul.f32 %v1517, 1.442695
    %v1519 = vpow.pop %v1518
    %v1520 = vadd.f32 %v1519, 1.0
    %v1521 = vrcp.pop %v1520
    %v1522 = vmul.f32 1.0, %v1521
    %v1523 = vadd.f32 %v224, %v1444
    %v1524 = vxor.u32 %v1523, 2147483648
    %v1525 = vmul.f32 %v1524, 1.442695
    %v1526 = vpow.pop %v1525
    %v1527 = vadd.f32 %v1526, 1.0
    %v1528 = vrcp.pop %v1527
    %v1529 = vmul.f32 1.0, %v1528
    %v1530 = vmul.f32 %v1522, %v1513
    %v1531 = vadd.f32 %v329, %v1530
    %v1532 = vtanh.pop %v1531
    %v1533 = vsub.f32 1.0, %v1529
    %v1534 = vmul.f32 %v1533, %v1532
    %v1535 = vmul.f32 %v1529, %v1374
    %v1536 = vadd.f32 %v1534, %v1535
    %1537 = vmatprep.subr.mxu0 %v340
    %1538 = vmatpush1.msra.mxu0 %v339
    %1539 = vmatprep.subr.mxu0 %v343
    %1540 = vmatpush1.msra.mxu0 %v342
    %1541 = vmatprep.subr.mxu0 %v346
    %1542 = vmatpush1.msra.mxu0 %v345
    %1543 = vmatprep.subr.mxu0 %v349
    %1544 = vmatpush1.msra.mxu0 %v348
    %1545 = vmatprep.subr.mxu0 %v352
    %1546 = vmatpush1.msra.mxu0 %v351
    %1547 = vmatprep.subr.mxu0 %v355
    %1548 = vmatpush1.msra.mxu0 %v354
    %1549 = vmatprep.subr.mxu0 %v358
    %1550 = vmatpush1.msra.mxu0 %v357
    %1551 = vmatprep.subr.mxu0 %v361
    %1552 = vmatpush1.msra.mxu0 %v360
    %1553 = vmatprep.subr.mxu0 %v364
    %1554 = vmatpush1.msra.mxu0 %v363
    %1555 = vmatprep.subr.mxu0 %v367
    %1556 = vmatpush1.msra.mxu0 %v366
    %1557 = vmatprep.subr.mxu0 %v370
    %1558 = vmatpush1.msra.mxu0 %v369
    %1559 = vmatprep.subr.mxu0 %v373
    %1560 = vmatpush1.msra.mxu0 %v372
    %1561 = vmatprep.subr.mxu0 %v376
    %1562 = vmatpush1.msra.mxu0 %v375
    %1563 = vmatprep.subr.mxu0 %v379
    %1564 = vmatpush1.msra.mxu0 %v378
    %1565 = vmatprep.subr.mxu0 %v382
    %1566 = vmatpush1.msra.mxu0 %v381
    %1567 = vmatprep.subr.mxu0 %v385
    %1568 = vmatpush1.msra.mxu0 %v384
    %1569 = vmatprep.subr.mxu0 0.0
    %1570 = vmatpush1.msra.mxu0 0.0
    %1571 = vmatprep.subr.mxu0 0.0
    %1572 = vmatpush1.msra.mxu0 0.0
    %1573 = vmatprep.subr.mxu0 0.0
    %1574 = vmatpush1.msra.mxu0 0.0
    %1575 = vmatprep.subr.mxu0 0.0
    %1576 = vmatpush1.msra.mxu0 0.0
    %1577 = vmatprep.subr.mxu0 0.0
    %1578 = vmatpush1.msra.mxu0 0.0
    %1579 = vmatprep.subr.mxu0 0.0
    %1580 = vmatpush1.msra.mxu0 0.0
    %1581 = vmatprep.subr.mxu0 0.0
    %1582 = vmatpush1.msra.mxu0 0.0
    %1583 = vmatprep.subr.mxu0 0.0
    %1584 = vmatpush1.msra.mxu0 0.0
    %1585 = vmatprep.subr.mxu0 0.0
    %1586 = vmatpush1.msra.mxu0 0.0
    %1587 = vmatprep.subr.mxu0 0.0
    %1588 = vmatpush1.msra.mxu0 0.0
    %1589 = vmatprep.subr.mxu0 0.0
    %1590 = vmatpush1.msra.mxu0 0.0
    %1591 = vmatprep.subr.mxu0 0.0
    %1592 = vmatpush1.msra.mxu0 0.0
    %1593 = vmatprep.subr.mxu0 0.0
    %1594 = vmatpush1.msra.mxu0 0.0
    %1595 = vmatprep.subr.mxu0 0.0
    %1596 = vmatpush1.msra.mxu0 0.0
    %1597 = vmatprep.subr.mxu0 0.0
    %1598 = vmatpush1.msra.mxu0 0.0
    %1599 = vmatprep.subr.mxu0 0.0
    %1600 = vmatpush1.msra.mxu0 0.0
    %1601 = vmatprep.mubr.f32.mxu0 0.0
    %1602 = vmatmul.mubr.f32.gmra.mrb[0].mxu0 %v1536
    %v1603 = vpop.f32.mrb[0].mxu0
    %v1604 = vadd.f32 %v391, %v1603
    %v1605 = vpop.f32.mrb[0].mxu0
    %v1606 = vadd.f32 %v395, %v1605
    %1607 = vdwg.mxu0
    %1608 = vmatprep.subr.mxu0 0.0
    %1609 = vmatpush1.msra.mxu0 %v341
    %1610 = vmatprep.subr.mxu0 0.0
    %1611 = vmatpush1.msra.mxu0 %v344
    %1612 = vmatprep.subr.mxu0 0.0
    %1613 = vmatpush1.msra.mxu0 %v347
    %1614 = vmatprep.subr.mxu0 0.0
    %1615 = vmatpush1.msra.mxu0 %v350
    %1616 = vmatprep.subr.mxu0 0.0
    %1617 = vmatpush1.msra.mxu0 %v353
    %1618 = vmatprep.subr.mxu0 0.0
    %1619 = vmatpush1.msra.mxu0 %v356
    %1620 = vmatprep.subr.mxu0 0.0
    %1621 = vmatpush1.msra.mxu0 %v359
    %1622 = vmatprep.subr.mxu0 0.0
    %1623 = vmatpush1.msra.mxu0 %v362
    %1624 = vmatprep.subr.mxu0 0.0
    %1625 = vmatpush1.msra.mxu0 %v365
    %1626 = vmatprep.subr.mxu0 0.0
    %1627 = vmatpush1.msra.mxu0 %v368
    %1628 = vmatprep.subr.mxu0 0.0
    %1629 = vmatpush1.msra.mxu0 %v371
    %1630 = vmatprep.subr.mxu0 0.0
    %1631 = vmatpush1.msra.mxu0 %v374
    %1632 = vmatprep.subr.mxu0 0.0
    %1633 = vmatpush1.msra.mxu0 %v377
    %1634 = vmatprep.subr.mxu0 0.0
    %1635 = vmatpush1.msra.mxu0 %v380
    %1636 = vmatprep.subr.mxu0 0.0
    %1637 = vmatpush1.msra.mxu0 %v383
    %1638 = vmatprep.subr.mxu0 0.0
    %1639 = vmatpush1.msra.mxu0 %v386
    %1640 = vmatprep.subr.mxu0 0.0
    %1641 = vmatpush1.msra.mxu0 0.0
    %1642 = vmatprep.subr.mxu0 0.0
    %1643 = vmatpush1.msra.mxu0 0.0
    %1644 = vmatprep.subr.mxu0 0.0
    %1645 = vmatpush1.msra.mxu0 0.0
    %1646 = vmatprep.subr.mxu0 0.0
    %1647 = vmatpush1.msra.mxu0 0.0
    %1648 = vmatprep.subr.mxu0 0.0
    %1649 = vmatpush1.msra.mxu0 0.0
    %1650 = vmatprep.subr.mxu0 0.0
    %1651 = vmatpush1.msra.mxu0 0.0
    %1652 = vmatprep.subr.mxu0 0.0
    %1653 = vmatpush1.msra.mxu0 0.0
    %1654 = vmatprep.subr.mxu0 0.0
    %1655 = vmatpush1.msra.mxu0 0.0
    %1656 = vmatprep.subr.mxu0 0.0
    %1657 = vmatpush1.msra.mxu0 0.0
    %1658 = vmatprep.subr.mxu0 0.0
    %1659 = vmatpush1.msra.mxu0 0.0
    %1660 = vmatprep.subr.mxu0 0.0
    %1661 = vmatpush1.msra.mxu0 0.0
    %1662 = vmatprep.subr.mxu0 0.0
    %1663 = vmatpush1.msra.mxu0 0.0
    %1664 = vmatprep.subr.mxu0 0.0
    %1665 = vmatpush1.msra.mxu0 0.0
    %1666 = vmatprep.subr.mxu0 0.0
    %1667 = vmatpush1.msra.mxu0 0.0
    %1668 = vmatprep.subr.mxu0 0.0
    %1669 = vmatpush1.msra.mxu0 0.0
    %1670 = vmatprep.subr.mxu0 0.0
    %1671 = vmatpush1.msra.mxu0 0.0
    %1672 = vmatprep.mubr.f32.mxu0 0.0
    %1673 = vmatmul.mubr.f32.gmra.mrb[0].mxu0 %v1536
    %v1674 = vpop.f32.mrb[0].mxu0
    %v1675 = vadd.f32 %v399, %v1674
    %v1676 = vpop.f32.mrb[0].mxu0
    %1677 = vdwg.mxu0
    %v1678 = vadd.f32 %v228, %v1604
    %v1679 = vxor.u32 %v1678, 2147483648
    %v1680 = vmul.f32 %v1679, 1.442695
    %v1681 = vpow.pop %v1680
    %v1682 = vadd.f32 %v1681, 1.0
    %v1683 = vrcp.pop %v1682
    %v1684 = vmul.f32 1.0, %v1683
    %v1685 = vadd.f32 %v230, %v1606
    %v1686 = vxor.u32 %v1685, 2147483648
    %v1687 = vmul.f32 %v1686, 1.442695
    %v1688 = vpow.pop %v1687
    %v1689 = vadd.f32 %v1688, 1.0
    %v1690 = vrcp.pop %v1689
    %v1691 = vmul.f32 1.0, %v1690
    %v1692 = vmul.f32 %v1684, %v1675
    %v1693 = vadd.f32 %v334, %v1692
    %v1694 = vtanh.pop %v1693
    %v1695 = vsub.f32 1.0, %v1691
    %v1696 = vmul.f32 %v1695, %v1694
    %v1697 = vmul.f32 %v1691, %v1536
    %v1698 = vadd.f32 %v1696, %v1697
    %v1700 = vrot.slane %v1698, 4
    %v1702 = vsub.f32 %v1698, %v1700
    %v1703 = vmul.f32 %v1698, %v1700
    %v1704 = vld [vmem:[#allocation4] sm:$0xff]
    %v1705 = vld [vmem:[#allocation4 + $0x8] sm:$0xff]
    %v1706 = vld [vmem:[#allocation4 + $0x10] sm:$0xff]
    %v1707 = vld [vmem:[#allocation4 + $0x18] sm:$0xff]
    %v1708 = vld [vmem:[#allocation4 + $0x20] sm:$0xff]
    %v1709 = vld [vmem:[#allocation4 + $0x28] sm:$0xff]
    %v1710 = vld [vmem:[#allocation4 + $0x30] sm:$0xff]
    %v1711 = vld [vmem:[#allocation4 + $0x38] sm:$0xff]
    %v1712 = vld [vmem:[#allocation4 + $0x40] sm:$0xff]
    %v1713 = vld [vmem:[#allocation4 + $0x48] sm:$0xff]
    %v1714 = vld [vmem:[#allocation4 + $0x50] sm:$0xff]
    %v1715 = vld [vmem:[#allocation4 + $0x58] sm:$0xff]
    %v1716 = vld [vmem:[#allocation4 + $0x60] sm:$0xff]
    %v1717 = vld [vmem:[#allocation4 + $0x68] sm:$0xff]
    %v1718 = vld [vmem:[#allocation4 + $0x70] sm:$0xff]
    %v1719 = vld [vmem:[#allocation4 + $0x78] sm:$0xff]
    %v1720 = vld [vmem:[#allocation4 + $0x80] sm:$0xff]
    %v1721 = vld [vmem:[#allocation4 + $0x88] sm:$0xff]
    %v1722 = vld [vmem:[#allocation4 + $0x90] sm:$0xff]
    %v1723 = vld [vmem:[#allocation4 + $0x98] sm:$0xff]
    %v1724 = vld [vmem:[#allocation4 + $0xa0] sm:$0xff]
    %v1725 = vld [vmem:[#allocation4 + $0xa8] sm:$0xff]
    %v1726 = vld [vmem:[#allocation4 + $0xb0] sm:$0xff]
    %v1727 = vld [vmem:[#allocation4 + $0xb8] sm:$0xff]
    %v1728 = vld [vmem:[#allocation4 + $0xc0] sm:$0xff]
    %v1729 = vld [vmem:[#allocation4 + $0xc8] sm:$0xff]
    %v1730 = vld [vmem:[#allocation4 + $0xd0] sm:$0xff]
    %v1731 = vld [vmem:[#allocation4 + $0xd8] sm:$0xff]
    %v1732 = vld [vmem:[#allocation4 + $0xe0] sm:$0xff]
    %v1733 = vld [vmem:[#allocation4 + $0xe8] sm:$0xff]
    %v1734 = vld [vmem:[#allocation4 + $0xf0] sm:$0xff]
    %v1735 = vld [vmem:[#allocation4 + $0xf8] sm:$0xff]
    %v1736 = vld [vmem:[#allocation4 + $0x100] sm:$0xff]
    %v1737 = vld [vmem:[#allocation4 + $0x108] sm:$0xff]
    %v1738 = vld [vmem:[#allocation4 + $0x110] sm:$0xff]
    %v1739 = vld [vmem:[#allocation4 + $0x118] sm:$0xff]
    %v1740 = vld [vmem:[#allocation4 + $0x120] sm:$0xff]
    %v1741 = vld [vmem:[#allocation4 + $0x128] sm:$0xff]
    %v1742 = vld [vmem:[#allocation4 + $0x130] sm:$0xff]
    %v1743 = vld [vmem:[#allocation4 + $0x138] sm:$0xff]
    %v1744 = vld [vmem:[#allocation4 + $0x140] sm:$0xff]
    %v1745 = vld [vmem:[#allocation4 + $0x148] sm:$0xff]
    %v1746 = vld [vmem:[#allocation4 + $0x150] sm:$0xff]
    %v1747 = vld [vmem:[#allocation4 + $0x158] sm:$0xff]
    %v1748 = vld [vmem:[#allocation4 + $0x160] sm:$0xff]
    %v1749 = vld [vmem:[#allocation4 + $0x168] sm:$0xff]
    %v1750 = vld [vmem:[#allocation4 + $0x170] sm:$0xff]
    %v1751 = vld [vmem:[#allocation4 + $0x178] sm:$0xff]
    %v1752 = vld [vmem:[#allocation4 + $0x180] sm:$0xff]
    %v1753 = vld [vmem:[#allocation4 + $0x188] sm:$0xff]
    %v1754 = vld [vmem:[#allocation4 + $0x190] sm:$0xff]
    %v1755 = vld [vmem:[#allocation4 + $0x198] sm:$0xff]
    %v1756 = vld [vmem:[#allocation4 + $0x1a0] sm:$0xff]
    %v1757 = vld [vmem:[#allocation4 + $0x1a8] sm:$0xff]
    %v1758 = vld [vmem:[#allocation4 + $0x1b0] sm:$0xff]
    %v1759 = vld [vmem:[#allocation4 + $0x1b8] sm:$0xff]
    %v1760 = vld [vmem:[#allocation4 + $0x1c0] sm:$0xff]
    %v1761 = vld [vmem:[#allocation4 + $0x1c8] sm:$0xff]
    %v1762 = vld [vmem:[#allocation4 + $0x1d0] sm:$0xff]
    %v1763 = vld [vmem:[#allocation4 + $0x1d8] sm:$0xff]
    %v1764 = vld [vmem:[#allocation4 + $0x1e0] sm:$0xff]
    %v1765 = vld [vmem:[#allocation4 + $0x1e8] sm:$0xff]
    %v1766 = vld [vmem:[#allocation4 + $0x1f0] sm:$0xff]
    %v1767 = vld [vmem:[#allocation4 + $0x1f8] sm:$0xff]
    %v1768 = vld [vmem:[%s5] sm:$0x1]
    %v1770 = vlaneseq
    %v1771 = vshrl.u32 %v1770, 7
    %v1772 = vsub.s32 0, %v1771
    %v1773 = vrot.slane %v1768, %v1772
    %1775 = vmatprep.subr.mxu0 0.0
    %1776 = vmatpush1.msra.mxu0 %v1704
    %1777 = vmatprep.subr.mxu0 0.0
    %1778 = vmatpush1.msra.mxu0 %v1705
    %1779 = vmatprep.subr.mxu0 0.0
    %1780 = vmatpush1.msra.mxu0 %v1706
    %1781 = vmatprep.subr.mxu0 0.0
    %1782 = vmatpush1.msra.mxu0 %v1707
    %1783 = vmatprep.subr.mxu0 0.0
    %1784 = vmatpush1.msra.mxu0 %v1708
    %1785 = vmatprep.subr.mxu0 0.0
    %1786 = vmatpush1.msra.mxu0 %v1709
    %1787 = vmatprep.subr.mxu0 0.0
    %1788 = vmatpush1.msra.mxu0 %v1710
    %1789 = vmatprep.subr.mxu0 0.0
    %1790 = vmatpush1.msra.mxu0 %v1711
    %1791 = vmatprep.subr.mxu0 0.0
    %1792 = vmatpush1.msra.mxu0 %v1712
    %1793 = vmatprep.subr.mxu0 0.0
    %1794 = vmatpush1.msra.mxu0 %v1713
    %1795 = vmatprep.subr.mxu0 0.0
    %1796 = vmatpush1.msra.mxu0 %v1714
    %1797 = vmatprep.subr.mxu0 0.0
    %1798 = vmatpush1.msra.mxu0 %v1715
    %1799 = vmatprep.subr.mxu0 0.0
    %1800 = vmatpush1.msra.mxu0 %v1716
    %1801 = vmatprep.subr.mxu0 0.0
    %1802 = vmatpush1.msra.mxu0 %v1717
    %1803 = vmatprep.subr.mxu0 0.0
    %1804 = vmatpush1.msra.mxu0 %v1718
    %1805 = vmatprep.subr.mxu0 0.0
    %1806 = vmatpush1.msra.mxu0 %v1719
    %1807 = vmatprep.subr.mxu0 0.0
    %1808 = vmatpush1.msra.mxu0 %v1720
    %1809 = vmatprep.subr.mxu0 0.0
    %1810 = vmatpush1.msra.mxu0 %v1721
    %1811 = vmatprep.subr.mxu0 0.0
    %1812 = vmatpush1.msra.mxu0 %v1722
    %1813 = vmatprep.subr.mxu0 0.0
    %1814 = vmatpush1.msra.mxu0 %v1723
    %1815 = vmatprep.subr.mxu0 0.0
    %1816 = vmatpush1.msra.mxu0 %v1724
    %1817 = vmatprep.subr.mxu0 0.0
    %1818 = vmatpush1.msra.mxu0 %v1725
    %1819 = vmatprep.subr.mxu0 0.0
    %1820 = vmatpush1.msra.mxu0 %v1726
    %1821 = vmatprep.subr.mxu0 0.0
    %1822 = vmatpush1.msra.mxu0 %v1727
    %1823 = vmatprep.subr.mxu0 0.0
    %1824 = vmatpush1.msra.mxu0 %v1728
    %1825 = vmatprep.subr.mxu0 0.0
    %1826 = vmatpush1.msra.mxu0 %v1729
    %1827 = vmatprep.subr.mxu0 0.0
    %1828 = vmatpush1.msra.mxu0 %v1730
    %1829 = vmatprep.subr.mxu0 0.0
    %1830 = vmatpush1.msra.mxu0 %v1731
    %1831 = vmatprep.subr.mxu0 0.0
    %1832 = vmatpush1.msra.mxu0 %v1732
    %1833 = vmatprep.subr.mxu0 0.0
    %1834 = vmatpush1.msra.mxu0 %v1733
    %1835 = vmatprep.subr.mxu0 0.0
    %1836 = vmatpush1.msra.mxu0 %v1734
    %1837 = vmatprep.subr.mxu0 0.0
    %1838 = vmatpush1.msra.mxu0 %v1735
    %1839 = vmatprep.mubr.f32.mxu0 %v1700
    %1840 = vmatmul.mubr.f32.gmra.mrb[0].mxu0 %v1698
    %v1841 = vpop.f32.mrb[0].mxu0
    %v1842 = vadd.f32 %v1773, %v1841
    %v1843 = vpop.f32.mrb[0].mxu0
    %1844 = vdwg.mxu0
    %1845 = vmatprep.subr.mxu0 0.0
    %1846 = vmatpush1.msra.mxu0 %v1736
    %1847 = vmatprep.subr.mxu0 0.0
    %1848 = vmatpush1.msra.mxu0 %v1737
    %1849 = vmatprep.subr.mxu0 0.0
    %1850 = vmatpush1.msra.mxu0 %v1738
    %1851 = vmatprep.subr.mxu0 0.0
    %1852 = vmatpush1.msra.mxu0 %v1739
    %1853 = vmatprep.subr.mxu0 0.0
    %1854 = vmatpush1.msra.mxu0 %v1740
    %1855 = vmatprep.subr.mxu0 0.0
    %1856 = vmatpush1.msra.mxu0 %v1741
    %1857 = vmatprep.subr.mxu0 0.0
    %1858 = vmatpush1.msra.mxu0 %v1742
    %1859 = vmatprep.subr.mxu0 0.0
    %1860 = vmatpush1.msra.mxu0 %v1743
    %1861 = vmatprep.subr.mxu0 0.0
    %1862 = vmatpush1.msra.mxu0 %v1744
    %1863 = vmatprep.subr.mxu0 0.0
    %1864 = vmatpush1.msra.mxu0 %v1745
    %1865 = vmatprep.subr.mxu0 0.0
    %1866 = vmatpush1.msra.mxu0 %v1746
    %1867 = vmatprep.subr.mxu0 0.0
    %1868 = vmatpush1.msra.mxu0 %v1747
    %1869 = vmatprep.subr.mxu0 0.0
    %1870 = vmatpush1.msra.mxu0 %v1748
    %1871 = vmatprep.subr.mxu0 0.0
    %1872 = vmatpush1.msra.mxu0 %v1749
    %1873 = vmatprep.subr.mxu0 0.0
    %1874 = vmatpush1.msra.mxu0 %v1750
    %1875 = vmatprep.subr.mxu0 0.0
    %1876 = vmatpush1.msra.mxu0 %v1751
    %1877 = vmatprep.subr.mxu0 0.0
    %1878 = vmatpush1.msra.mxu0 %v1752
    %1879 = vmatprep.subr.mxu0 0.0
    %1880 = vmatpush1.msra.mxu0 %v1753
    %1881 = vmatprep.subr.mxu0 0.0
    %1882 = vmatpush1.msra.mxu0 %v1754
    %1883 = vmatprep.subr.mxu0 0.0
    %1884 = vmatpush1.msra.mxu0 %v1755
    %1885 = vmatprep.subr.mxu0 0.0
    %1886 = vmatpush1.msra.mxu0 %v1756
    %1887 = vmatprep.subr.mxu0 0.0
    %1888 = vmatpush1.msra.mxu0 %v1757
    %1889 = vmatprep.subr.mxu0 0.0
    %1890 = vmatpush1.msra.mxu0 %v1758
    %1891 = vmatprep.subr.mxu0 0.0
    %1892 = vmatpush1.msra.mxu0 %v1759
    %1893 = vmatprep.subr.mxu0 0.0
    %1894 = vmatpush1.msra.mxu0 %v1760
    %1895 = vmatprep.subr.mxu0 0.0
    %1896 = vmatpush1.msra.mxu0 %v1761
    %1897 = vmatprep.subr.mxu0 0.0
    %1898 = vmatpush1.msra.mxu0 %v1762
    %1899 = vmatprep.subr.mxu0 0.0
    %1900 = vmatpush1.msra.mxu0 %v1763
    %1901 = vmatprep.subr.mxu0 0.0
    %1902 = vmatpush1.msra.mxu0 %v1764
    %1903 = vmatprep.subr.mxu0 0.0
    %1904 = vmatpush1.msra.mxu0 %v1765
    %1905 = vmatprep.subr.mxu0 0.0
    %1906 = vmatpush1.msra.mxu0 %v1766
    %1907 = vmatprep.subr.mxu0 0.0
    %1908 = vmatpush1.msra.mxu0 %v1767
    %1909 = vmatprep.mubr.f32.mxu0 %v1703
    %1910 = vmatmul.mubr.f32.gmra.mrb[0].mxu0 %v1702
    %v1911 = vpop.f32.mrb[0].mxu0
    %v1912 = vadd.f32 %v1842, %v1911
    %v1913 = vpop.f32.mrb[0].mxu0
    %1914 = vdwg.mxu0
    %vm1915 = vcmask 1043456
    %v1916 = vsel %vm1915, %v1912, 0.0
    %v1917 = vrot.slane %v1916, 4
    %v1918 = vadd.f32 %v1916, %v1917
    %v1919 = vrot.slane %v1918, 2
    %v1920 = vadd.f32 %v1918, %v1919
    %v1921 = vrot.slane %v1920, 1
    %v1922 = vadd.f32 %v1920, %v1921
    %v1923 = vrcp.pop 4.0
    %v1924 = vmul.f32 %v1922, %v1923
    %v1925 = vsub.f32 %v1912, %v1924
    %v1926 = vmul.f32 %v1925, %v1925
    %v1927 = vsel %vm1915, %v1926, 0.0
    %v1928 = vrot.slane %v1927, 4
    %v1929 = vadd.f32 %v1927, %v1928
    %v1930 = vrot.slane %v1929, 2
    %v1931 = vadd.f32 %v1929, %v1930
    %v1932 = vrot.slane %v1931, 1
    %v1933 = vadd.f32 %v1931, %v1932
    %v1934 = vmul.f32 %v1933, %v1923
    %v1935 = vadd.f32 %v1934, 1e-05
    %v1936 = vrsqrt.pop %v1935
    %v1937 = vmul.f32 %v1925, %v1936
    %v1938 = vmax.f32 %v1937, 0.0
    %v1939 = vld [vmem:[%s6] sm:$0xff]
    %v1940 = vld [vmem:[%s6 + $0x8] sm:$0xff]
    %v1941 = vld [vmem:[%s6 + $0x10] sm:$0xff]
    %v1942 = vld [vmem:[%s6 + $0x18] sm:$0xff]
    %v1943 = vld [vmem:[%s6 + $0x20] sm:$0xff]
    %v1944 = vld [vmem:[%s6 + $0x28] sm:$0xff]
    %v1945 = vld [vmem:[%s6 + $0x30] sm:$0xff]
    %v1946 = vld [vmem:[%s6 + $0x38] sm:$0xff]
    %v1947 = vld [vmem:[%s6 + $0x40] sm:$0xff]
    %v1948 = vld [vmem:[%s6 + $0x48] sm:$0xff]
    %v1949 = vld [vmem:[%s6 + $0x50] sm:$0xff]
    %v1950 = vld [vmem:[%s6 + $0x58] sm:$0xff]
    %v1951 = vld [vmem:[%s6 + $0x60] sm:$0xff]
    %v1952 = vld [vmem:[%s6 + $0x68] sm:$0xff]
    %v1953 = vld [vmem:[%s6 + $0x70] sm:$0xff]
    %v1954 = vld [vmem:[%s6 + $0x78] sm:$0xff]
    %v1955 = vld [vmem:[%s7] sm:$0x1]
    %v1957 = vlaneseq
    %v1958 = vshrl.u32 %v1957, 7
    %v1959 = vsub.s32 0, %v1958
    %v1960 = vrot.slane %v1955, %v1959
    %1962 = vmatprep.subr.mxu0 0.0
    %1963 = vmatpush1.msra.mxu0 %v1939
    %1964 = vmatprep.subr.mxu0 0.0
    %1965 = vmatpush1.msra.mxu0 %v1940
    %1966 = vmatprep.subr.mxu0 0.0
    %1967 = vmatpush1.msra.mxu0 %v1941
    %1968 = vmatprep.subr.mxu0 0.0
    %1969 = vmatpush1.msra.mxu0 %v1942
    %1970 = vmatprep.subr.mxu0 0.0
    %1971 = vmatpush1.msra.mxu0 %v1943
    %1972 = vmatprep.subr.mxu0 0.0
    %1973 = vmatpush1.msra.mxu0 %v1944
    %1974 = vmatprep.subr.mxu0 0.0
    %1975 = vmatpush1.msra.mxu0 %v1945
    %1976 = vmatprep.subr.mxu0 0.0
    %1977 = vmatpush1.msra.mxu0 %v1946
    %1978 = vmatprep.subr.mxu0 0.0
    %1979 = vmatpush1.msra.mxu0 %v1947
    %1980 = vmatprep.subr.mxu0 0.0
    %1981 = vmatpush1.msra.mxu0 %v1948
    %1982 = vmatprep.subr.mxu0 0.0
    %1983 = vmatpush1.msra.mxu0 %v1949
    %1984 = vmatprep.subr.mxu0 0.0
    %1985 = vmatpush1.msra.mxu0 %v1950
    %1986 = vmatprep.subr.mxu0 0.0
    %1987 = vmatpush1.msra.mxu0 %v1951
    %1988 = vmatprep.subr.mxu0 0.0
    %1989 = vmatpush1.msra.mxu0 %v1952
    %1990 = vmatprep.subr.mxu0 0.0
    %1991 = vmatpush1.msra.mxu0 %v1953
    %1992 = vmatprep.subr.mxu0 0.0
    %1993 = vmatpush1.msra.mxu0 %v1954
    %1994 = vmatprep.subr.mxu0 0.0
    %1995 = vmatpush1.msra.mxu0 0.0
    %1996 = vmatprep.subr.mxu0 0.0
    %1997 = vmatpush1.msra.mxu0 0.0
    %1998 = vmatprep.subr.mxu0 0.0
    %1999 = vmatpush1.msra.mxu0 0.0
    %2000 = vmatprep.subr.mxu0 0.0
    %2001 = vmatpush1.msra.mxu0 0.0
    %2002 = vmatprep.subr.mxu0 0.0
    %2003 = vmatpush1.msra.mxu0 0.0
    %2004 = vmatprep.subr.mxu0 0.0
    %2005 = vmatpush1.msra.mxu0 0.0
    %2006 = vmatprep.subr.mxu0 0.0
    %2007 = vmatpush1.msra.mxu0 0.0
    %2008 = vmatprep.subr.mxu0 0.0
    %2009 = vmatpush1.msra.mxu0 0.0
    %2010 = vmatprep.subr.mxu0 0.0
    %2011 = vmatpush1.msra.mxu0 0.0
    %2012 = vmatprep.subr.mxu0 0.0
    %2013 = vmatpush1.msra.mxu0 0.0
    %2014 = vmatprep.subr.mxu0 0.0
    %2015 = vmatpush1.msra.mxu0 0.0
    %2016 = vmatprep.subr.mxu0 0.0
    %2017 = vmatpush1.msra.mxu0 0.0
    %2018 = vmatprep.subr.mxu0 0.0
    %2019 = vmatpush1.msra.mxu0 0.0
    %2020 = vmatprep.subr.mxu0 0.0
    %2021 = vmatpush1.msra.mxu0 0.0
    %2022 = vmatprep.subr.mxu0 0.0
    %2023 = vmatpush1.msra.mxu0 0.0
    %2024 = vmatprep.subr.mxu0 0.0
    %2025 = vmatpush1.msra.mxu0 0.0
    %2026 = vmatprep.mubr.f32.mxu0 0.0
    %2027 = vmatmul.mubr.f32.gmra.mrb[0].mxu0 %v1938
    %v2028 = vpop.f32.mrb[0].mxu0
    %v2029 = vadd.f32 %v1960, %v2028
    %v2030 = vpop.f32.mrb[0].mxu0
    %2031 = vdwg.mxu0
    %vm2032 = vcmask 11264
    %v2033 = vsel %vm2032, %v2029, -inf
    %2034 = vmax.xlane.f32.xlu0 %v2033
    %v2035 = vpop.xlane.xlu0 %2034
    %v2036 = vsub.f32 %v2029, %v2035
    %v2037 = vmul.f32 %v2036, 1.442695
    %v2038 = vpow.pop %v2037
    %v2039 = vsel %vm2032, %v2038, 0.0
    %2040 = vadd.xlane.f32.xlu0 %v2039
    %v2041 = vpop.xlane.xlu0 %2040
    %v2042 = vlog2.pop %v2041
    %v2043 = vmul.f32 %v2042, 0.6931472
    %v2044 = vsub.f32 %v2036, %v2043
    %2045 = vst.msk [vmem:[%s8] sm:$0xf] %vm2032, %v2044
    // Predicated region
    $region42: #{model_forward.1} parent=1 // pred_check
      _
    $region43: #{model_forward.1} parent=1 // pred_check_branch
      %2047 = sbr.rel (0) target = $region45
    $region44: #{model_forward.1} parent=1 // pred_region
      _
    $region45: #{model_forward.1} parent=1 // pred_fallthru
      _
    // Predicated region
    $region46: #{model_forward.1} parent=1 // pred_check
      _
    $region47: #{model_forward.1} parent=1 // pred_check_branch
      %2049 = sbr.rel (0) target = $region49
    $region48: #{model_forward.1} parent=1 // pred_region
      _
    $region49: #{model_forward.1} parent=1 // pred_fallthru
      _
    %2050 = vsyncpa [#allocation3], 1
    %2051 = vsyncpa [#allocation5], 1

</llo_original>
